<compile_context>
chip_gen: v5e
topology: v5e:2x2
jax: 0.10.0
libtpu: 0.0.40
codegen_flags: <defaults>
</compile_context>

<pallas_src>
import functools

import jax
import jax.numpy as jnp
from jax import lax
from jax.experimental import pallas as pl
from jax.experimental.pallas import tpu as pltpu


def mha_kernel(q_ref, k_ref, v_ref, mask_ref,
               wq_ref, bq_ref, wk_ref, bk_ref, wv_ref, bv_ref, wo_ref, bo_ref,
               out_ref, *, num_heads, head_dim, batch_tile, seq_len):
    Bt, S = batch_tile, seq_len
    E = num_heads * head_dim
    f32 = jnp.float32
    bf16 = jnp.bfloat16

    # ---- QKV projections: flatten the batch tile into the MXU M dimension ----
    xq = q_ref[...].reshape(Bt * S, E).astype(bf16)
    xk = k_ref[...].reshape(Bt * S, E).astype(bf16)
    xv = v_ref[...].reshape(Bt * S, E).astype(bf16)

    wq = wq_ref[...]   # already bf16
    wk = wk_ref[...]
    wv = wv_ref[...]
    wo = wo_ref[...]

    scale = f32(1.0 / (head_dim ** 0.5))
    # Fold 1/sqrt(hd) into Q once instead of scaling every (S, S) energy tile.
    Q = ((jnp.dot(xq, wq, preferred_element_type=f32) + bq_ref[0]) * scale).astype(bf16)
    K = (jnp.dot(xk, wk, preferred_element_type=f32) + bk_ref[0]).astype(bf16)
    V = (jnp.dot(xv, wv, preferred_element_type=f32) + bv_ref[0]).astype(bf16)

    neg_fill = f32(-1e10)
    bo = bo_ref[0]
    # Contract last dims of Q and K directly: (S, hd) x (S, hd) -> (S, S).
    dn_qk = (((1,), (1,)), ((), ()))

    for b in range(Bt):                       # static unroll over the batch tile
        rows = slice(b * S, (b + 1) * S)
        Qb, Kb, Vb = Q[rows], K[rows], V[rows]
        # Mask compare hoisted out of the head loop (bool select == vadd cost).
        keep_b = mask_ref[b] != 0             # (S, S) bool, int8 source

        acc = jnp.zeros((S, E), f32)          # f32 output-projection accumulator
        for h in range(num_heads):            # static unroll over heads
            lo = h * head_dim
            hi = lo + head_dim
            Qh = Qb[:, lo:hi]
            Kh = Kb[:, lo:hi]
            Vh = Vb[:, lo:hi]

            # energy = (Q/sqrt(hd)) K^T, no explicit transpose of K.
            energy = lax.dot_general(Qh, Kh, dn_qk, preferred_element_type=f32)
            # masked_fill(mask == 0, -1e10)
            energy = jnp.where(keep_b, energy, neg_fill)

            # numerically stable softmax along the key axis (f32).
            m = jnp.max(energy, axis=-1, keepdims=True)
            p = jnp.exp(energy - m)
            attn = p * pl.reciprocal(jnp.sum(p, axis=-1, keepdims=True), approx=True)

            head = jnp.dot(attn.astype(bf16), Vh, preferred_element_type=f32)
            # Accumulate output projection per head instead of concatenating.
            acc = acc + jnp.dot(head.astype(bf16), wo[lo:hi, :],
                                preferred_element_type=f32)

        out_ref[b] = (acc + bo).astype(out_ref.dtype)


def _pick_batch_tile(batch, seq, target_rows=128):
    """Largest divisor of `batch` whose flattened row count fits target_rows."""
    bt = 1
    for cand in range(1, batch + 1):
        if batch % cand == 0 and cand * seq <= target_rows:
            bt = cand
    return bt


def multi_head_attention(queries, keys, values, mask, params, *, num_heads):
    B, S, E = queries.shape
    head_dim = E // num_heads
    assert head_dim * num_heads == E

    wq, bq, wk, bk, wv, bv, wo, bo = params
    # Weights only feed the MXU: ship them bf16 (f32 accumulation in-kernel).
    wq = wq.astype(jnp.bfloat16)
    wk = wk.astype(jnp.bfloat16)
    wv = wv.astype(jnp.bfloat16)
    wo = wo.astype(jnp.bfloat16)
    # Mask is the only S^2-sized input — ship it as int8 (nonzero == keep).
    if mask.dtype != jnp.int8:
        mask = (mask != 0).astype(jnp.int8)

    bt = _pick_batch_tile(B, S)
    grid = (B // bt,)

    act_spec = pl.BlockSpec((bt, S, E), lambda i: (i, 0, 0))
    mask_spec = pl.BlockSpec((bt, S, S), lambda i: (i, 0, 0))
    # Constant index_maps: weights/biases stay resident, no per-step re-DMA.
    w_spec = pl.BlockSpec((E, E), lambda i: (0, 0))
    b_spec = pl.BlockSpec((1, E), lambda i: (0, 0))

    kernel = functools.partial(mha_kernel, num_heads=num_heads,
                               head_dim=head_dim, batch_tile=bt, seq_len=S)

    return pl.pallas_call(
        kernel,
        out_shape=jax.ShapeDtypeStruct((B, S, E), queries.dtype),
        grid_spec=pltpu.PrefetchScalarGridSpec(
            num_scalar_prefetch=0,
            grid=grid,
            in_specs=[act_spec, act_spec, act_spec, mask_spec,
                      w_spec, b_spec, w_spec, b_spec,
                      w_spec, b_spec, w_spec, b_spec],
            out_specs=act_spec,
        ),
        compiler_params=pltpu.CompilerParams(
            dimension_semantics=("parallel",),
            vmem_limit_bytes=64 * 1024 * 1024),
    )(queries, keys, values, mask, wq, bq, wk, bk, wv, bv, wo, bo)


def reference_mha(queries, keys, values, mask, params, *, num_heads):
    """Pure-JAX f32 mirror of the PyTorch forward (correctness check)."""
    wq, bq, wk, bk, wv, bv, wo, bo = params
    B, S, E = queries.shape
    hd = E // num_heads

    def split(x):  # (B,S,E) -> (B,H,S,hd)
        return x.reshape(B, S, num_heads, hd).transpose(0, 2, 1, 3)

    Q = split(queries @ wq + bq[0])
    K = split(keys @ wk + bk[0])
    V = split(values @ wv + bv[0])
    energy = jnp.einsum("bhqd,bhkd->bhqk", Q, K) / (hd ** 0.5)
    energy = jnp.where(mask[:, None, :, :] == 0, -1e10, energy)
    attn = jax.nn.softmax(energy, axis=-1)
    out = jnp.einsum("bhqk,bhkd->bhqd", attn, V)
    out = out.transpose(0, 2, 1, 3).reshape(B, S, E)
    return out @ wo + bo[0]


if __name__ == "__main__":
    # Small shapes consistent with the module: embed_dim divisible by num_heads.
    B, S, E, H = 2, 16, 128, 4

    key = jax.random.PRNGKey(0)
    ks = jax.random.split(key, 12)

    queries = jax.random.normal(ks[0], (B, S, E), dtype=jnp.float32)
    keys_in = jax.random.normal(ks[1], (B, S, E), dtype=jnp.float32)
    values = jax.random.normal(ks[2], (B, S, E), dtype=jnp.float32)

    # Causal-style mask (1 = keep, 0 = masked), shape (B, S, S), int8.
    mask = jnp.tile(jnp.tril(jnp.ones((S, S), dtype=jnp.int8))[None], (B, 1, 1))

    def init_linear(kw, kb):
        w = jax.random.normal(kw, (E, E), dtype=jnp.float32) * 0.05
        b = jax.random.normal(kb, (1, E), dtype=jnp.float32) * 0.05
        return w, b

    wq, bq = init_linear(ks[3], ks[4])
    wk, bk = init_linear(ks[5], ks[6])
    wv, bv = init_linear(ks[7], ks[8])
    wo, bo = init_linear(ks[9], ks[10])
    params = (wq, bq, wk, bk, wv, bv, wo, bo)

    out = multi_head_attention(queries, keys_in, values, mask, params, num_heads=H)
    out = jax.block_until_ready(out)

    ref = reference_mha(queries, keys_in, values, mask, params, num_heads=H)
    assert out.shape == (B, S, E)
    # Tolerance loosened for the bf16-MXU / approx-reciprocal path (f32 accum).
    assert jnp.allclose(out, ref, atol=5e-2, rtol=5e-2), "mismatch vs JAX reference"

    print("KERNEL_OK")
</pallas_src>

<mosaic_0001>
module attributes {stable_mosaic.version = 11 : i64} {
  func.func @mha_kernel(%arg0: i32, %arg1: memref<2x16x128xf32, #tpu.memory_space<vmem>>, %arg2: memref<2x16x128xf32, #tpu.memory_space<vmem>>, %arg3: memref<2x16x128xf32, #tpu.memory_space<vmem>>, %arg4: memref<2x16x16xi8, #tpu.memory_space<vmem>>, %arg5: memref<128x128xbf16, #tpu.memory_space<vmem>>, %arg6: memref<1x128xf32, #tpu.memory_space<vmem>>, %arg7: memref<128x128xbf16, #tpu.memory_space<vmem>>, %arg8: memref<1x128xf32, #tpu.memory_space<vmem>>, %arg9: memref<128x128xbf16, #tpu.memory_space<vmem>>, %arg10: memref<1x128xf32, #tpu.memory_space<vmem>>, %arg11: memref<128x128xbf16, #tpu.memory_space<vmem>>, %arg12: memref<1x128xf32, #tpu.memory_space<vmem>>, %arg13: memref<2x16x128xf32, #tpu.memory_space<vmem>>) attributes {dimension_semantics = [#tpu.dimension_semantics<parallel>], iteration_bounds = array<i64: 1>, scalar_prefetch = 0 : i64, scratch_operands = 0 : i64, tpu.core_type = #tpu.core_type<tc>, window_params = [{transform_indices = @transform_0, window_bounds = array<i64: 2, 16, 128>}, {transform_indices = @transform_1, window_bounds = array<i64: 2, 16, 128>}, {transform_indices = @transform_2, window_bounds = array<i64: 2, 16, 128>}, {transform_indices = @transform_3, window_bounds = array<i64: 2, 16, 16>}, {pipeline_mode = #tpu.pipeline_mode<synchronous>, transform_indices = @transform_4, window_bounds = array<i64: 128, 128>}, {pipeline_mode = #tpu.pipeline_mode<synchronous>, transform_indices = @transform_5, window_bounds = array<i64: 1, 128>}, {pipeline_mode = #tpu.pipeline_mode<synchronous>, transform_indices = @transform_6, window_bounds = array<i64: 128, 128>}, {pipeline_mode = #tpu.pipeline_mode<synchronous>, transform_indices = @transform_7, window_bounds = array<i64: 1, 128>}, {pipeline_mode = #tpu.pipeline_mode<synchronous>, transform_indices = @transform_8, window_bounds = array<i64: 128, 128>}, {pipeline_mode = #tpu.pipeline_mode<synchronous>, transform_indices = @transform_9, window_bounds = array<i64: 1, 128>}, {pipeline_mode = #tpu.pipeline_mode<synchronous>, transform_indices = @transform_10, window_bounds = array<i64: 128, 128>}, {pipeline_mode = #tpu.pipeline_mode<synchronous>, transform_indices = @transform_11, window_bounds = array<i64: 1, 128>}, {transform_indices = @transform_12, window_bounds = array<i64: 2, 16, 128>}]} {
    %c0 = arith.constant 0 : index
    %c0_0 = arith.constant 0 : index
    %c0_1 = arith.constant 0 : index
    %0 = vector.load %arg1[%c0, %c0_0, %c0_1] : memref<2x16x128xf32, #tpu.memory_space<vmem>>, vector<2x16x128xf32>
    %1 = vector.shape_cast %0 : vector<2x16x128xf32> to vector<32x128xf32>
    %2 = arith.truncf %1 : vector<32x128xf32> to vector<32x128xbf16>
    %c0_2 = arith.constant 0 : index
    %c0_3 = arith.constant 0 : index
    %c0_4 = arith.constant 0 : index
    %3 = vector.load %arg2[%c0_2, %c0_3, %c0_4] : memref<2x16x128xf32, #tpu.memory_space<vmem>>, vector<2x16x128xf32>
    %4 = vector.shape_cast %3 : vector<2x16x128xf32> to vector<32x128xf32>
    %5 = arith.truncf %4 : vector<32x128xf32> to vector<32x128xbf16>
    %c0_5 = arith.constant 0 : index
    %c0_6 = arith.constant 0 : index
    %c0_7 = arith.constant 0 : index
    %6 = vector.load %arg3[%c0_5, %c0_6, %c0_7] : memref<2x16x128xf32, #tpu.memory_space<vmem>>, vector<2x16x128xf32>
    %7 = vector.shape_cast %6 : vector<2x16x128xf32> to vector<32x128xf32>
    %8 = arith.truncf %7 : vector<32x128xf32> to vector<32x128xbf16>
    %c0_8 = arith.constant 0 : index
    %c0_9 = arith.constant 0 : index
    %9 = vector.load %arg5[%c0_8, %c0_9] : memref<128x128xbf16, #tpu.memory_space<vmem>>, vector<128x128xbf16>
    %c0_10 = arith.constant 0 : index
    %c0_11 = arith.constant 0 : index
    %10 = vector.load %arg7[%c0_10, %c0_11] : memref<128x128xbf16, #tpu.memory_space<vmem>>, vector<128x128xbf16>
    %c0_12 = arith.constant 0 : index
    %c0_13 = arith.constant 0 : index
    %11 = vector.load %arg9[%c0_12, %c0_13] : memref<128x128xbf16, #tpu.memory_space<vmem>>, vector<128x128xbf16>
    %c0_14 = arith.constant 0 : index
    %c0_15 = arith.constant 0 : index
    %12 = vector.load %arg11[%c0_14, %c0_15] : memref<128x128xbf16, #tpu.memory_space<vmem>>, vector<128x128xbf16>
    %cst = arith.constant dense<0.000000e+00> : vector<32x128xf32>
    %13 = tpu.matmul %2, %9, %cst {dimension_numbers = #tpu.dot_dimension_numbers<[1], [0], [0], [1], [0, 0, 1, 1], [], []>} : vector<32x128xbf16>, vector<128x128xbf16>, vector<32x128xf32> -> vector<32x128xf32>
    %c0_16 = arith.constant 0 : index
    %c0_17 = arith.constant 0 : index
    %14 = vector.load %arg6[%c0_16, %c0_17] : memref<1x128xf32, #tpu.memory_space<vmem>>, vector<1x128xf32>
    %15 = vector.shape_cast %14 : vector<1x128xf32> to vector<128xf32>
    %16 = vector.shape_cast %15 : vector<128xf32> to vector<1x128xf32>
    %17 = vector.broadcast %16 : vector<1x128xf32> to vector<32x128xf32>
    %18 = arith.addf %13, %17 : vector<32x128xf32>
    %cst_18 = arith.constant 0.176776692 : f32
    %19 = vector.broadcast %cst_18 : f32 to vector<32x128xf32>
    %20 = arith.mulf %18, %19 : vector<32x128xf32>
    %21 = arith.truncf %20 : vector<32x128xf32> to vector<32x128xbf16>
    %cst_19 = arith.constant dense<0.000000e+00> : vector<32x128xf32>
    %22 = tpu.matmul %5, %10, %cst_19 {dimension_numbers = #tpu.dot_dimension_numbers<[1], [0], [0], [1], [0, 0, 1, 1], [], []>} : vector<32x128xbf16>, vector<128x128xbf16>, vector<32x128xf32> -> vector<32x128xf32>
    %c0_20 = arith.constant 0 : index
    %c0_21 = arith.constant 0 : index
    %23 = vector.load %arg8[%c0_20, %c0_21] : memref<1x128xf32, #tpu.memory_space<vmem>>, vector<1x128xf32>
    %24 = vector.shape_cast %23 : vector<1x128xf32> to vector<128xf32>
    %25 = vector.shape_cast %24 : vector<128xf32> to vector<1x128xf32>
    %26 = vector.broadcast %25 : vector<1x128xf32> to vector<32x128xf32>
    %27 = arith.addf %22, %26 : vector<32x128xf32>
    %28 = arith.truncf %27 : vector<32x128xf32> to vector<32x128xbf16>
    %cst_22 = arith.constant dense<0.000000e+00> : vector<32x128xf32>
    %29 = tpu.matmul %8, %11, %cst_22 {dimension_numbers = #tpu.dot_dimension_numbers<[1], [0], [0], [1], [0, 0, 1, 1], [], []>} : vector<32x128xbf16>, vector<128x128xbf16>, vector<32x128xf32> -> vector<32x128xf32>
    %c0_23 = arith.constant 0 : index
    %c0_24 = arith.constant 0 : index
    %30 = vector.load %arg10[%c0_23, %c0_24] : memref<1x128xf32, #tpu.memory_space<vmem>>, vector<1x128xf32>
    %31 = vector.shape_cast %30 : vector<1x128xf32> to vector<128xf32>
    %32 = vector.shape_cast %31 : vector<128xf32> to vector<1x128xf32>
    %33 = vector.broadcast %32 : vector<1x128xf32> to vector<32x128xf32>
    %34 = arith.addf %29, %33 : vector<32x128xf32>
    %35 = arith.truncf %34 : vector<32x128xf32> to vector<32x128xbf16>
    %c0_25 = arith.constant 0 : index
    %c0_26 = arith.constant 0 : index
    %36 = vector.load %arg12[%c0_25, %c0_26] : memref<1x128xf32, #tpu.memory_space<vmem>>, vector<1x128xf32>
    %37 = vector.shape_cast %36 : vector<1x128xf32> to vector<128xf32>
    %38 = vector.extract_strided_slice %21 {offsets = [0, 0], sizes = [16, 128], strides = [1, 1]} : vector<32x128xbf16> to vector<16x128xbf16>
    %39 = vector.extract_strided_slice %28 {offsets = [0, 0], sizes = [16, 128], strides = [1, 1]} : vector<32x128xbf16> to vector<16x128xbf16>
    %40 = vector.extract_strided_slice %35 {offsets = [0, 0], sizes = [16, 128], strides = [1, 1]} : vector<32x128xbf16> to vector<16x128xbf16>
    %c0_27 = arith.constant 0 : index
    %c0_28 = arith.constant 0 : index
    %c0_29 = arith.constant 0 : index
    %41 = vector.load %arg4[%c0_27, %c0_28, %c0_29] : memref<2x16x16xi8, #tpu.memory_space<vmem>>, vector<1x16x16xi8>
    %42 = vector.shape_cast %41 : vector<1x16x16xi8> to vector<16x16xi8>
    %c0_i8 = arith.constant 0 : i8
    %43 = vector.broadcast %c0_i8 : i8 to vector<16x16xi8>
    %44 = arith.cmpi ne, %42, %43 : vector<16x16xi8>
    %cst_30 = arith.constant 0.000000e+00 : f32
    %45 = vector.broadcast %cst_30 : f32 to vector<16x128xf32>
    %46 = vector.extract_strided_slice %38 {offsets = [0, 0], sizes = [16, 32], strides = [1, 1]} : vector<16x128xbf16> to vector<16x32xbf16>
    %47 = vector.extract_strided_slice %39 {offsets = [0, 0], sizes = [16, 32], strides = [1, 1]} : vector<16x128xbf16> to vector<16x32xbf16>
    %48 = vector.extract_strided_slice %40 {offsets = [0, 0], sizes = [16, 32], strides = [1, 1]} : vector<16x128xbf16> to vector<16x32xbf16>
    %cst_31 = arith.constant dense<0.000000e+00> : vector<16x16xf32>
    %49 = tpu.matmul %46, %47, %cst_31 {dimension_numbers = #tpu.dot_dimension_numbers<[1], [1], [0], [0], [0, 0, 1, 0], [], []>} : vector<16x32xbf16>, vector<16x32xbf16>, vector<16x16xf32> -> vector<16x16xf32>
    %cst_32 = arith.constant -1.000000e+10 : f32
    %50 = vector.broadcast %cst_32 : f32 to vector<16x16xf32>
    %51 = arith.select %44, %49, %50 : vector<16x16xi1>, vector<16x16xf32>
    %cst_33 = arith.constant dense<0xFF800000> : vector<16xf32>
    %52 = vector.multi_reduction <maximumf>, %51, %cst_33 [1] : vector<16x16xf32> to vector<16xf32>
    %53 = vector.shape_cast %52 : vector<16xf32> to vector<16x1xf32>
    %54 = vector.broadcast %53 : vector<16x1xf32> to vector<16x16xf32>
    %55 = arith.subf %51, %54 : vector<16x16xf32>
    %56 = math.exp %55 : vector<16x16xf32>
    %cst_34 = arith.constant dense<0.000000e+00> : vector<16xf32>
    %57 = vector.multi_reduction <add>, %56, %cst_34 [1] : vector<16x16xf32> to vector<16xf32>
    %58 = vector.shape_cast %57 : vector<16xf32> to vector<16x1xf32>
    %59 = tpu.reciprocal %58 {approx = true} : vector<16x1xf32> -> vector<16x1xf32>
    %60 = vector.broadcast %59 : vector<16x1xf32> to vector<16x16xf32>
    %61 = arith.mulf %56, %60 : vector<16x16xf32>
    %62 = arith.truncf %61 : vector<16x16xf32> to vector<16x16xbf16>
    %cst_35 = arith.constant dense<0.000000e+00> : vector<16x32xf32>
    %63 = tpu.matmul %62, %48, %cst_35 {dimension_numbers = #tpu.dot_dimension_numbers<[1], [0], [0], [1], [0, 0, 1, 1], [], []>} : vector<16x16xbf16>, vector<16x32xbf16>, vector<16x32xf32> -> vector<16x32xf32>
    %64 = arith.truncf %63 : vector<16x32xf32> to vector<16x32xbf16>
    %65 = vector.extract_strided_slice %12 {offsets = [0, 0], sizes = [32, 128], strides = [1, 1]} : vector<128x128xbf16> to vector<32x128xbf16>
    %cst_36 = arith.constant dense<0.000000e+00> : vector<16x128xf32>
    %66 = tpu.matmul %64, %65, %cst_36 {dimension_numbers = #tpu.dot_dimension_numbers<[1], [0], [0], [1], [0, 0, 1, 1], [], []>} : vector<16x32xbf16>, vector<32x128xbf16>, vector<16x128xf32> -> vector<16x128xf32>
    %67 = arith.addf %45, %66 : vector<16x128xf32>
    %68 = vector.extract_strided_slice %38 {offsets = [0, 32], sizes = [16, 32], strides = [1, 1]} : vector<16x128xbf16> to vector<16x32xbf16>
    %69 = vector.extract_strided_slice %39 {offsets = [0, 32], sizes = [16, 32], strides = [1, 1]} : vector<16x128xbf16> to vector<16x32xbf16>
    %70 = vector.extract_strided_slice %40 {offsets = [0, 32], sizes = [16, 32], strides = [1, 1]} : vector<16x128xbf16> to vector<16x32xbf16>
    %cst_37 = arith.constant dense<0.000000e+00> : vector<16x16xf32>
    %71 = tpu.matmul %68, %69, %cst_37 {dimension_numbers = #tpu.dot_dimension_numbers<[1], [1], [0], [0], [0, 0, 1, 0], [], []>} : vector<16x32xbf16>, vector<16x32xbf16>, vector<16x16xf32> -> vector<16x16xf32>
    %cst_38 = arith.constant -1.000000e+10 : f32
    %72 = vector.broadcast %cst_38 : f32 to vector<16x16xf32>
    %73 = arith.select %44, %71, %72 : vector<16x16xi1>, vector<16x16xf32>
    %cst_39 = arith.constant dense<0xFF800000> : vector<16xf32>
    %74 = vector.multi_reduction <maximumf>, %73, %cst_39 [1] : vector<16x16xf32> to vector<16xf32>
    %75 = vector.shape_cast %74 : vector<16xf32> to vector<16x1xf32>
    %76 = vector.broadcast %75 : vector<16x1xf32> to vector<16x16xf32>
    %77 = arith.subf %73, %76 : vector<16x16xf32>
    %78 = math.exp %77 : vector<16x16xf32>
    %cst_40 = arith.constant dense<0.000000e+00> : vector<16xf32>
    %79 = vector.multi_reduction <add>, %78, %cst_40 [1] : vector<16x16xf32> to vector<16xf32>
    %80 = vector.shape_cast %79 : vector<16xf32> to vector<16x1xf32>
    %81 = tpu.reciprocal %80 {approx = true} : vector<16x1xf32> -> vector<16x1xf32>
    %82 = vector.broadcast %81 : vector<16x1xf32> to vector<16x16xf32>
    %83 = arith.mulf %78, %82 : vector<16x16xf32>
    %84 = arith.truncf %83 : vector<16x16xf32> to vector<16x16xbf16>
    %cst_41 = arith.constant dense<0.000000e+00> : vector<16x32xf32>
    %85 = tpu.matmul %84, %70, %cst_41 {dimension_numbers = #tpu.dot_dimension_numbers<[1], [0], [0], [1], [0, 0, 1, 1], [], []>} : vector<16x16xbf16>, vector<16x32xbf16>, vector<16x32xf32> -> vector<16x32xf32>
    %86 = arith.truncf %85 : vector<16x32xf32> to vector<16x32xbf16>
    %87 = vector.extract_strided_slice %12 {offsets = [32, 0], sizes = [32, 128], strides = [1, 1]} : vector<128x128xbf16> to vector<32x128xbf16>
    %cst_42 = arith.constant dense<0.000000e+00> : vector<16x128xf32>
    %88 = tpu.matmul %86, %87, %cst_42 {dimension_numbers = #tpu.dot_dimension_numbers<[1], [0], [0], [1], [0, 0, 1, 1], [], []>} : vector<16x32xbf16>, vector<32x128xbf16>, vector<16x128xf32> -> vector<16x128xf32>
    %89 = arith.addf %67, %88 : vector<16x128xf32>
    %90 = vector.extract_strided_slice %38 {offsets = [0, 64], sizes = [16, 32], strides = [1, 1]} : vector<16x128xbf16> to vector<16x32xbf16>
    %91 = vector.extract_strided_slice %39 {offsets = [0, 64], sizes = [16, 32], strides = [1, 1]} : vector<16x128xbf16> to vector<16x32xbf16>
    %92 = vector.extract_strided_slice %40 {offsets = [0, 64], sizes = [16, 32], strides = [1, 1]} : vector<16x128xbf16> to vector<16x32xbf16>
    %cst_43 = arith.constant dense<0.000000e+00> : vector<16x16xf32>
    %93 = tpu.matmul %90, %91, %cst_43 {dimension_numbers = #tpu.dot_dimension_numbers<[1], [1], [0], [0], [0, 0, 1, 0], [], []>} : vector<16x32xbf16>, vector<16x32xbf16>, vector<16x16xf32> -> vector<16x16xf32>
    %cst_44 = arith.constant -1.000000e+10 : f32
    %94 = vector.broadcast %cst_44 : f32 to vector<16x16xf32>
    %95 = arith.select %44, %93, %94 : vector<16x16xi1>, vector<16x16xf32>
    %cst_45 = arith.constant dense<0xFF800000> : vector<16xf32>
    %96 = vector.multi_reduction <maximumf>, %95, %cst_45 [1] : vector<16x16xf32> to vector<16xf32>
    %97 = vector.shape_cast %96 : vector<16xf32> to vector<16x1xf32>
    %98 = vector.broadcast %97 : vector<16x1xf32> to vector<16x16xf32>
    %99 = arith.subf %95, %98 : vector<16x16xf32>
    %100 = math.exp %99 : vector<16x16xf32>
    %cst_46 = arith.constant dense<0.000000e+00> : vector<16xf32>
    %101 = vector.multi_reduction <add>, %100, %cst_46 [1] : vector<16x16xf32> to vector<16xf32>
    %102 = vector.shape_cast %101 : vector<16xf32> to vector<16x1xf32>
    %103 = tpu.reciprocal %102 {approx = true} : vector<16x1xf32> -> vector<16x1xf32>
    %104 = vector.broadcast %103 : vector<16x1xf32> to vector<16x16xf32>
    %105 = arith.mulf %100, %104 : vector<16x16xf32>
    %106 = arith.truncf %105 : vector<16x16xf32> to vector<16x16xbf16>
    %cst_47 = arith.constant dense<0.000000e+00> : vector<16x32xf32>
    %107 = tpu.matmul %106, %92, %cst_47 {dimension_numbers = #tpu.dot_dimension_numbers<[1], [0], [0], [1], [0, 0, 1, 1], [], []>} : vector<16x16xbf16>, vector<16x32xbf16>, vector<16x32xf32> -> vector<16x32xf32>
    %108 = arith.truncf %107 : vector<16x32xf32> to vector<16x32xbf16>
    %109 = vector.extract_strided_slice %12 {offsets = [64, 0], sizes = [32, 128], strides = [1, 1]} : vector<128x128xbf16> to vector<32x128xbf16>
    %cst_48 = arith.constant dense<0.000000e+00> : vector<16x128xf32>
    %110 = tpu.matmul %108, %109, %cst_48 {dimension_numbers = #tpu.dot_dimension_numbers<[1], [0], [0], [1], [0, 0, 1, 1], [], []>} : vector<16x32xbf16>, vector<32x128xbf16>, vector<16x128xf32> -> vector<16x128xf32>
    %111 = arith.addf %89, %110 : vector<16x128xf32>
    %112 = vector.extract_strided_slice %38 {offsets = [0, 96], sizes = [16, 32], strides = [1, 1]} : vector<16x128xbf16> to vector<16x32xbf16>
    %113 = vector.extract_strided_slice %39 {offsets = [0, 96], sizes = [16, 32], strides = [1, 1]} : vector<16x128xbf16> to vector<16x32xbf16>
    %114 = vector.extract_strided_slice %40 {offsets = [0, 96], sizes = [16, 32], strides = [1, 1]} : vector<16x128xbf16> to vector<16x32xbf16>
    %cst_49 = arith.constant dense<0.000000e+00> : vector<16x16xf32>
    %115 = tpu.matmul %112, %113, %cst_49 {dimension_numbers = #tpu.dot_dimension_numbers<[1], [1], [0], [0], [0, 0, 1, 0], [], []>} : vector<16x32xbf16>, vector<16x32xbf16>, vector<16x16xf32> -> vector<16x16xf32>
    %cst_50 = arith.constant -1.000000e+10 : f32
    %116 = vector.broadcast %cst_50 : f32 to vector<16x16xf32>
    %117 = arith.select %44, %115, %116 : vector<16x16xi1>, vector<16x16xf32>
    %cst_51 = arith.constant dense<0xFF800000> : vector<16xf32>
    %118 = vector.multi_reduction <maximumf>, %117, %cst_51 [1] : vector<16x16xf32> to vector<16xf32>
    %119 = vector.shape_cast %118 : vector<16xf32> to vector<16x1xf32>
    %120 = vector.broadcast %119 : vector<16x1xf32> to vector<16x16xf32>
    %121 = arith.subf %117, %120 : vector<16x16xf32>
    %122 = math.exp %121 : vector<16x16xf32>
    %cst_52 = arith.constant dense<0.000000e+00> : vector<16xf32>
    %123 = vector.multi_reduction <add>, %122, %cst_52 [1] : vector<16x16xf32> to vector<16xf32>
    %124 = vector.shape_cast %123 : vector<16xf32> to vector<16x1xf32>
    %125 = tpu.reciprocal %124 {approx = true} : vector<16x1xf32> -> vector<16x1xf32>
    %126 = vector.broadcast %125 : vector<16x1xf32> to vector<16x16xf32>
    %127 = arith.mulf %122, %126 : vector<16x16xf32>
    %128 = arith.truncf %127 : vector<16x16xf32> to vector<16x16xbf16>
    %cst_53 = arith.constant dense<0.000000e+00> : vector<16x32xf32>
    %129 = tpu.matmul %128, %114, %cst_53 {dimension_numbers = #tpu.dot_dimension_numbers<[1], [0], [0], [1], [0, 0, 1, 1], [], []>} : vector<16x16xbf16>, vector<16x32xbf16>, vector<16x32xf32> -> vector<16x32xf32>
    %130 = arith.truncf %129 : vector<16x32xf32> to vector<16x32xbf16>
    %131 = vector.extract_strided_slice %12 {offsets = [96, 0], sizes = [32, 128], strides = [1, 1]} : vector<128x128xbf16> to vector<32x128xbf16>
    %cst_54 = arith.constant dense<0.000000e+00> : vector<16x128xf32>
    %132 = tpu.matmul %130, %131, %cst_54 {dimension_numbers = #tpu.dot_dimension_numbers<[1], [0], [0], [1], [0, 0, 1, 1], [], []>} : vector<16x32xbf16>, vector<32x128xbf16>, vector<16x128xf32> -> vector<16x128xf32>
    %133 = arith.addf %111, %132 : vector<16x128xf32>
    %134 = vector.shape_cast %37 : vector<128xf32> to vector<1x128xf32>
    %135 = vector.broadcast %134 : vector<1x128xf32> to vector<16x128xf32>
    %136 = arith.addf %133, %135 : vector<16x128xf32>
    %c0_55 = arith.constant 0 : index
    %c0_56 = arith.constant 0 : index
    %c0_57 = arith.constant 0 : index
    %137 = vector.load %arg13[%c0_55, %c0_56, %c0_57] : memref<2x16x128xf32, #tpu.memory_space<vmem>>, vector<1x16x128xf32>
    %138 = vector.shape_cast %137 : vector<1x16x128xf32> to vector<16x128xf32>
    %139 = vector.shape_cast %136 : vector<16x128xf32> to vector<1x16x128xf32>
    tpu.vector_store %arg13[%c0_55, %c0_56, %c0_57], %139 {strides = array<i32>} : memref<2x16x128xf32, #tpu.memory_space<vmem>>, vector<1x16x128xf32>,
    %140 = vector.extract_strided_slice %21 {offsets = [16, 0], sizes = [16, 128], strides = [1, 1]} : vector<32x128xbf16> to vector<16x128xbf16>
    %141 = vector.extract_strided_slice %28 {offsets = [16, 0], sizes = [16, 128], strides = [1, 1]} : vector<32x128xbf16> to vector<16x128xbf16>
    %142 = vector.extract_strided_slice %35 {offsets = [16, 0], sizes = [16, 128], strides = [1, 1]} : vector<32x128xbf16> to vector<16x128xbf16>
    %c1 = arith.constant 1 : index
    %c0_58 = arith.constant 0 : index
    %c0_59 = arith.constant 0 : index
    %143 = vector.load %arg4[%c1, %c0_58, %c0_59] : memref<2x16x16xi8, #tpu.memory_space<vmem>>, vector<1x16x16xi8>
    %144 = vector.shape_cast %143 : vector<1x16x16xi8> to vector<16x16xi8>
    %c0_i8_60 = arith.constant 0 : i8
    %145 = vector.broadcast %c0_i8_60 : i8 to vector<16x16xi8>
    %146 = arith.cmpi ne, %144, %145 : vector<16x16xi8>
    %cst_61 = arith.constant 0.000000e+00 : f32
    %147 = vector.broadcast %cst_61 : f32 to vector<16x128xf32>
    %148 = vector.extract_strided_slice %140 {offsets = [0, 0], sizes = [16, 32], strides = [1, 1]} : vector<16x128xbf16> to vector<16x32xbf16>
    %149 = vector.extract_strided_slice %141 {offsets = [0, 0], sizes = [16, 32], strides = [1, 1]} : vector<16x128xbf16> to vector<16x32xbf16>
    %150 = vector.extract_strided_slice %142 {offsets = [0, 0], sizes = [16, 32], strides = [1, 1]} : vector<16x128xbf16> to vector<16x32xbf16>
    %cst_62 = arith.constant dense<0.000000e+00> : vector<16x16xf32>
    %151 = tpu.matmul %148, %149, %cst_62 {dimension_numbers = #tpu.dot_dimension_numbers<[1], [1], [0], [0], [0, 0, 1, 0], [], []>} : vector<16x32xbf16>, vector<16x32xbf16>, vector<16x16xf32> -> vector<16x16xf32>
    %cst_63 = arith.constant -1.000000e+10 : f32
    %152 = vector.broadcast %cst_63 : f32 to vector<16x16xf32>
    %153 = arith.select %146, %151, %152 : vector<16x16xi1>, vector<16x16xf32>
    %cst_64 = arith.constant dense<0xFF800000> : vector<16xf32>
    %154 = vector.multi_reduction <maximumf>, %153, %cst_64 [1] : vector<16x16xf32> to vector<16xf32>
    %155 = vector.shape_cast %154 : vector<16xf32> to vector<16x1xf32>
    %156 = vector.broadcast %155 : vector<16x1xf32> to vector<16x16xf32>
    %157 = arith.subf %153, %156 : vector<16x16xf32>
    %158 = math.exp %157 : vector<16x16xf32>
    %cst_65 = arith.constant dense<0.000000e+00> : vector<16xf32>
    %159 = vector.multi_reduction <add>, %158, %cst_65 [1] : vector<16x16xf32> to vector<16xf32>
    %160 = vector.shape_cast %159 : vector<16xf32> to vector<16x1xf32>
    %161 = tpu.reciprocal %160 {approx = true} : vector<16x1xf32> -> vector<16x1xf32>
    %162 = vector.broadcast %161 : vector<16x1xf32> to vector<16x16xf32>
    %163 = arith.mulf %158, %162 : vector<16x16xf32>
    %164 = arith.truncf %163 : vector<16x16xf32> to vector<16x16xbf16>
    %cst_66 = arith.constant dense<0.000000e+00> : vector<16x32xf32>
    %165 = tpu.matmul %164, %150, %cst_66 {dimension_numbers = #tpu.dot_dimension_numbers<[1], [0], [0], [1], [0, 0, 1, 1], [], []>} : vector<16x16xbf16>, vector<16x32xbf16>, vector<16x32xf32> -> vector<16x32xf32>
    %166 = arith.truncf %165 : vector<16x32xf32> to vector<16x32xbf16>
    %167 = vector.extract_strided_slice %12 {offsets = [0, 0], sizes = [32, 128], strides = [1, 1]} : vector<128x128xbf16> to vector<32x128xbf16>
    %cst_67 = arith.constant dense<0.000000e+00> : vector<16x128xf32>
    %168 = tpu.matmul %166, %167, %cst_67 {dimension_numbers = #tpu.dot_dimension_numbers<[1], [0], [0], [1], [0, 0, 1, 1], [], []>} : vector<16x32xbf16>, vector<32x128xbf16>, vector<16x128xf32> -> vector<16x128xf32>
    %169 = arith.addf %147, %168 : vector<16x128xf32>
    %170 = vector.extract_strided_slice %140 {offsets = [0, 32], sizes = [16, 32], strides = [1, 1]} : vector<16x128xbf16> to vector<16x32xbf16>
    %171 = vector.extract_strided_slice %141 {offsets = [0, 32], sizes = [16, 32], strides = [1, 1]} : vector<16x128xbf16> to vector<16x32xbf16>
    %172 = vector.extract_strided_slice %142 {offsets = [0, 32], sizes = [16, 32], strides = [1, 1]} : vector<16x128xbf16> to vector<16x32xbf16>
    %cst_68 = arith.constant dense<0.000000e+00> : vector<16x16xf32>
    %173 = tpu.matmul %170, %171, %cst_68 {dimension_numbers = #tpu.dot_dimension_numbers<[1], [1], [0], [0], [0, 0, 1, 0], [], []>} : vector<16x32xbf16>, vector<16x32xbf16>, vector<16x16xf32> -> vector<16x16xf32>
    %cst_69 = arith.constant -1.000000e+10 : f32
    %174 = vector.broadcast %cst_69 : f32 to vector<16x16xf32>
    %175 = arith.select %146, %173, %174 : vector<16x16xi1>, vector<16x16xf32>
    %cst_70 = arith.constant dense<0xFF800000> : vector<16xf32>
    %176 = vector.multi_reduction <maximumf>, %175, %cst_70 [1] : vector<16x16xf32> to vector<16xf32>
    %177 = vector.shape_cast %176 : vector<16xf32> to vector<16x1xf32>
    %178 = vector.broadcast %177 : vector<16x1xf32> to vector<16x16xf32>
    %179 = arith.subf %175, %178 : vector<16x16xf32>
    %180 = math.exp %179 : vector<16x16xf32>
    %cst_71 = arith.constant dense<0.000000e+00> : vector<16xf32>
    %181 = vector.multi_reduction <add>, %180, %cst_71 [1] : vector<16x16xf32> to vector<16xf32>
    %182 = vector.shape_cast %181 : vector<16xf32> to vector<16x1xf32>
    %183 = tpu.reciprocal %182 {approx = true} : vector<16x1xf32> -> vector<16x1xf32>
    %184 = vector.broadcast %183 : vector<16x1xf32> to vector<16x16xf32>
    %185 = arith.mulf %180, %184 : vector<16x16xf32>
    %186 = arith.truncf %185 : vector<16x16xf32> to vector<16x16xbf16>
    %cst_72 = arith.constant dense<0.000000e+00> : vector<16x32xf32>
    %187 = tpu.matmul %186, %172, %cst_72 {dimension_numbers = #tpu.dot_dimension_numbers<[1], [0], [0], [1], [0, 0, 1, 1], [], []>} : vector<16x16xbf16>, vector<16x32xbf16>, vector<16x32xf32> -> vector<16x32xf32>
    %188 = arith.truncf %187 : vector<16x32xf32> to vector<16x32xbf16>
    %189 = vector.extract_strided_slice %12 {offsets = [32, 0], sizes = [32, 128], strides = [1, 1]} : vector<128x128xbf16> to vector<32x128xbf16>
    %cst_73 = arith.constant dense<0.000000e+00> : vector<16x128xf32>
    %190 = tpu.matmul %188, %189, %cst_73 {dimension_numbers = #tpu.dot_dimension_numbers<[1], [0], [0], [1], [0, 0, 1, 1], [], []>} : vector<16x32xbf16>, vector<32x128xbf16>, vector<16x128xf32> -> vector<16x128xf32>
    %191 = arith.addf %169, %190 : vector<16x128xf32>
    %192 = vector.extract_strided_slice %140 {offsets = [0, 64], sizes = [16, 32], strides = [1, 1]} : vector<16x128xbf16> to vector<16x32xbf16>
    %193 = vector.extract_strided_slice %141 {offsets = [0, 64], sizes = [16, 32], strides = [1, 1]} : vector<16x128xbf16> to vector<16x32xbf16>
    %194 = vector.extract_strided_slice %142 {offsets = [0, 64], sizes = [16, 32], strides = [1, 1]} : vector<16x128xbf16> to vector<16x32xbf16>
    %cst_74 = arith.constant dense<0.000000e+00> : vector<16x16xf32>
    %195 = tpu.matmul %192, %193, %cst_74 {dimension_numbers = #tpu.dot_dimension_numbers<[1], [1], [0], [0], [0, 0, 1, 0], [], []>} : vector<16x32xbf16>, vector<16x32xbf16>, vector<16x16xf32> -> vector<16x16xf32>
    %cst_75 = arith.constant -1.000000e+10 : f32
    %196 = vector.broadcast %cst_75 : f32 to vector<16x16xf32>
    %197 = arith.select %146, %195, %196 : vector<16x16xi1>, vector<16x16xf32>
    %cst_76 = arith.constant dense<0xFF800000> : vector<16xf32>
    %198 = vector.multi_reduction <maximumf>, %197, %cst_76 [1] : vector<16x16xf32> to vector<16xf32>
    %199 = vector.shape_cast %198 : vector<16xf32> to vector<16x1xf32>
    %200 = vector.broadcast %199 : vector<16x1xf32> to vector<16x16xf32>
    %201 = arith.subf %197, %200 : vector<16x16xf32>
    %202 = math.exp %201 : vector<16x16xf32>
    %cst_77 = arith.constant dense<0.000000e+00> : vector<16xf32>
    %203 = vector.multi_reduction <add>, %202, %cst_77 [1] : vector<16x16xf32> to vector<16xf32>
    %204 = vector.shape_cast %203 : vector<16xf32> to vector<16x1xf32>
    %205 = tpu.reciprocal %204 {approx = true} : vector<16x1xf32> -> vector<16x1xf32>
    %206 = vector.broadcast %205 : vector<16x1xf32> to vector<16x16xf32>
    %207 = arith.mulf %202, %206 : vector<16x16xf32>
    %208 = arith.truncf %207 : vector<16x16xf32> to vector<16x16xbf16>
    %cst_78 = arith.constant dense<0.000000e+00> : vector<16x32xf32>
    %209 = tpu.matmul %208, %194, %cst_78 {dimension_numbers = #tpu.dot_dimension_numbers<[1], [0], [0], [1], [0, 0, 1, 1], [], []>} : vector<16x16xbf16>, vector<16x32xbf16>, vector<16x32xf32> -> vector<16x32xf32>
    %210 = arith.truncf %209 : vector<16x32xf32> to vector<16x32xbf16>
    %211 = vector.extract_strided_slice %12 {offsets = [64, 0], sizes = [32, 128], strides = [1, 1]} : vector<128x128xbf16> to vector<32x128xbf16>
    %cst_79 = arith.constant dense<0.000000e+00> : vector<16x128xf32>
    %212 = tpu.matmul %210, %211, %cst_79 {dimension_numbers = #tpu.dot_dimension_numbers<[1], [0], [0], [1], [0, 0, 1, 1], [], []>} : vector<16x32xbf16>, vector<32x128xbf16>, vector<16x128xf32> -> vector<16x128xf32>
    %213 = arith.addf %191, %212 : vector<16x128xf32>
    %214 = vector.extract_strided_slice %140 {offsets = [0, 96], sizes = [16, 32], strides = [1, 1]} : vector<16x128xbf16> to vector<16x32xbf16>
    %215 = vector.extract_strided_slice %141 {offsets = [0, 96], sizes = [16, 32], strides = [1, 1]} : vector<16x128xbf16> to vector<16x32xbf16>
    %216 = vector.extract_strided_slice %142 {offsets = [0, 96], sizes = [16, 32], strides = [1, 1]} : vector<16x128xbf16> to vector<16x32xbf16>
    %cst_80 = arith.constant dense<0.000000e+00> : vector<16x16xf32>
    %217 = tpu.matmul %214, %215, %cst_80 {dimension_numbers = #tpu.dot_dimension_numbers<[1], [1], [0], [0], [0, 0, 1, 0], [], []>} : vector<16x32xbf16>, vector<16x32xbf16>, vector<16x16xf32> -> vector<16x16xf32>
    %cst_81 = arith.constant -1.000000e+10 : f32
    %218 = vector.broadcast %cst_81 : f32 to vector<16x16xf32>
    %219 = arith.select %146, %217, %218 : vector<16x16xi1>, vector<16x16xf32>
    %cst_82 = arith.constant dense<0xFF800000> : vector<16xf32>
    %220 = vector.multi_reduction <maximumf>, %219, %cst_82 [1] : vector<16x16xf32> to vector<16xf32>
    %221 = vector.shape_cast %220 : vector<16xf32> to vector<16x1xf32>
    %222 = vector.broadcast %221 : vector<16x1xf32> to vector<16x16xf32>
    %223 = arith.subf %219, %222 : vector<16x16xf32>
    %224 = math.exp %223 : vector<16x16xf32>
    %cst_83 = arith.constant dense<0.000000e+00> : vector<16xf32>
    %225 = vector.multi_reduction <add>, %224, %cst_83 [1] : vector<16x16xf32> to vector<16xf32>
    %226 = vector.shape_cast %225 : vector<16xf32> to vector<16x1xf32>
    %227 = tpu.reciprocal %226 {approx = true} : vector<16x1xf32> -> vector<16x1xf32>
    %228 = vector.broadcast %227 : vector<16x1xf32> to vector<16x16xf32>
    %229 = arith.mulf %224, %228 : vector<16x16xf32>
    %230 = arith.truncf %229 : vector<16x16xf32> to vector<16x16xbf16>
    %cst_84 = arith.constant dense<0.000000e+00> : vector<16x32xf32>
    %231 = tpu.matmul %230, %216, %cst_84 {dimension_numbers = #tpu.dot_dimension_numbers<[1], [0], [0], [1], [0, 0, 1, 1], [], []>} : vector<16x16xbf16>, vector<16x32xbf16>, vector<16x32xf32> -> vector<16x32xf32>
    %232 = arith.truncf %231 : vector<16x32xf32> to vector<16x32xbf16>
    %233 = vector.extract_strided_slice %12 {offsets = [96, 0], sizes = [32, 128], strides = [1, 1]} : vector<128x128xbf16> to vector<32x128xbf16>
    %cst_85 = arith.constant dense<0.000000e+00> : vector<16x128xf32>
    %234 = tpu.matmul %232, %233, %cst_85 {dimension_numbers = #tpu.dot_dimension_numbers<[1], [0], [0], [1], [0, 0, 1, 1], [], []>} : vector<16x32xbf16>, vector<32x128xbf16>, vector<16x128xf32> -> vector<16x128xf32>
    %235 = arith.addf %213, %234 : vector<16x128xf32>
    %236 = vector.shape_cast %37 : vector<128xf32> to vector<1x128xf32>
    %237 = vector.broadcast %236 : vector<1x128xf32> to vector<16x128xf32>
    %238 = arith.addf %235, %237 : vector<16x128xf32>
    %c1_86 = arith.constant 1 : index
    %c0_87 = arith.constant 0 : index
    %c0_88 = arith.constant 0 : index
    %239 = vector.load %arg13[%c1_86, %c0_87, %c0_88] : memref<2x16x128xf32, #tpu.memory_space<vmem>>, vector<1x16x128xf32>
    %240 = vector.shape_cast %239 : vector<1x16x128xf32> to vector<16x128xf32>
    %241 = vector.shape_cast %238 : vector<16x128xf32> to vector<1x16x128xf32>
    tpu.vector_store %arg13[%c1_86, %c0_87, %c0_88], %241 {strides = array<i32>} : memref<2x16x128xf32, #tpu.memory_space<vmem>>, vector<1x16x128xf32>,
    return
  }
  func.func @transform_0(%arg0: i32) -> (i32, i32, i32) {
    %c0_i32 = arith.constant 0 : i32
    %c0_i32_0 = arith.constant 0 : i32
    %c0_i32_1 = arith.constant 0 : i32
    return %arg0, %c0_i32, %c0_i32_0 : i32, i32, i32
  }
  func.func @transform_1(%arg0: i32) -> (i32, i32, i32) {
    %c0_i32 = arith.constant 0 : i32
    %c0_i32_0 = arith.constant 0 : i32
    %c0_i32_1 = arith.constant 0 : i32
    return %arg0, %c0_i32, %c0_i32_0 : i32, i32, i32
  }
  func.func @transform_2(%arg0: i32) -> (i32, i32, i32) {
    %c0_i32 = arith.constant 0 : i32
    %c0_i32_0 = arith.constant 0 : i32
    %c0_i32_1 = arith.constant 0 : i32
    return %arg0, %c0_i32, %c0_i32_0 : i32, i32, i32
  }
  func.func @transform_3(%arg0: i32) -> (i32, i32, i32) {
    %c0_i32 = arith.constant 0 : i32
    %c0_i32_0 = arith.constant 0 : i32
    %c0_i32_1 = arith.constant 0 : i32
    return %arg0, %c0_i32, %c0_i32_0 : i32, i32, i32
  }
  func.func @transform_4(%arg0: i32) -> (i32, i32) {
    %c0_i32 = arith.constant 0 : i32
    %c0_i32_0 = arith.constant 0 : i32
    %c0_i32_1 = arith.constant 0 : i32
    return %c0_i32, %c0_i32_0 : i32, i32
  }
  func.func @transform_5(%arg0: i32) -> (i32, i32) {
    %c0_i32 = arith.constant 0 : i32
    %c0_i32_0 = arith.constant 0 : i32
    %c0_i32_1 = arith.constant 0 : i32
    return %c0_i32, %c0_i32_0 : i32, i32
  }
  func.func @transform_6(%arg0: i32) -> (i32, i32) {
    %c0_i32 = arith.constant 0 : i32
    %c0_i32_0 = arith.constant 0 : i32
    %c0_i32_1 = arith.constant 0 : i32
    return %c0_i32, %c0_i32_0 : i32, i32
  }
  func.func @transform_7(%arg0: i32) -> (i32, i32) {
    %c0_i32 = arith.constant 0 : i32
    %c0_i32_0 = arith.constant 0 : i32
    %c0_i32_1 = arith.constant 0 : i32
    return %c0_i32, %c0_i32_0 : i32, i32
  }
  func.func @transform_8(%arg0: i32) -> (i32, i32) {
    %c0_i32 = arith.constant 0 : i32
    %c0_i32_0 = arith.constant 0 : i32
    %c0_i32_1 = arith.constant 0 : i32
    return %c0_i32, %c0_i32_0 : i32, i32
  }
  func.func @transform_9(%arg0: i32) -> (i32, i32) {
    %c0_i32 = arith.constant 0 : i32
    %c0_i32_0 = arith.constant 0 : i32
    %c0_i32_1 = arith.constant 0 : i32
    return %c0_i32, %c0_i32_0 : i32, i32
  }
  func.func @transform_10(%arg0: i32) -> (i32, i32) {
    %c0_i32 = arith.constant 0 : i32
    %c0_i32_0 = arith.constant 0 : i32
    %c0_i32_1 = arith.constant 0 : i32
    return %c0_i32, %c0_i32_0 : i32, i32
  }
  func.func @transform_11(%arg0: i32) -> (i32, i32) {
    %c0_i32 = arith.constant 0 : i32
    %c0_i32_0 = arith.constant 0 : i32
    %c0_i32_1 = arith.constant 0 : i32
    return %c0_i32, %c0_i32_0 : i32, i32
  }
  func.func @transform_12(%arg0: i32) -> (i32, i32, i32) {
    %c0_i32 = arith.constant 0 : i32
    %c0_i32_0 = arith.constant 0 : i32
    %c0_i32_1 = arith.constant 0 : i32
    return %arg0, %c0_i32, %c0_i32_0 : i32, i32, i32
  }
}

</mosaic_0001>

<llo_original>
// kernel: tpu_custom_call.1
$region0: #{tpu_custom_call.1}
  #allocation0 [shape = 'u32[]', space=smem, size = 0x4, offset = 0x4, fixed_abs, tag = 'smem constant byte address 0x4 - core index']
  #allocation1 [shape = 'u32[72,128]{1,0:T(1,128)}', space=vmem, size = 0x9000, scoped, tag = 'internal scratch']
  %s0 = inlined_call_operand.hbm [shape: f32[2,16,128], index: 0, kind: input, shape index: {}]
  %s1 = inlined_call_operand.hbm [shape: f32[2,16,128], index: 1, kind: input, shape index: {}]
  %s2 = inlined_call_operand.hbm [shape: f32[2,16,128], index: 2, kind: input, shape index: {}]
  %s3 = inlined_call_operand.hbm [shape: s8[2,16,16], index: 3, kind: input, shape index: {}]
  %s4 = inlined_call_operand.hbm [shape: bf16[128,128], index: 4, kind: input, shape index: {}]
  %s5 = inlined_call_operand.vmem [shape: f32[1,128], index: 5, kind: input, shape index: {}]
  %s6 = inlined_call_operand.hbm [shape: bf16[128,128], index: 6, kind: input, shape index: {}]
  %s7 = inlined_call_operand.vmem [shape: f32[1,128], index: 7, kind: input, shape index: {}]
  %s8 = inlined_call_operand.hbm [shape: bf16[128,128], index: 8, kind: input, shape index: {}]
  %s9 = inlined_call_operand.vmem [shape: f32[1,128], index: 9, kind: input, shape index: {}]
  %s10 = inlined_call_operand.hbm [shape: bf16[128,128], index: 10, kind: input, shape index: {}]
  %s11 = inlined_call_operand.vmem [shape: f32[1,128], index: 11, kind: input, shape index: {}]
  %s12 = inlined_call_operand.hbm [shape: f32[2,16,128], index: 12, kind: output, shape index: {}]
  %s13 = sld [smem:[#allocation0]]
  $region90: #{tpu_custom_call.1} parent=0
    _
  %s15 = ssub.s32 1, %s13
  %s16 = scalar_select 0, %s15, %s13
  $region1: #{tpu_custom_call.1} parent=0
    #allocation2 [shape = 'u8[16384]{0}', space=vmem, size = 0x4000, scoped, tag = 'input window, operand 0, single buffered']
    #allocation3 [shape = 's32[1]{0}', space=sflag, size = 0x4, scoped, tag = 'scoped memory for tpu_custom_call.1']
    #allocation4 [shape = 's32[1]{0}', space=sflag, size = 0x4, scoped, tag = 'scoped memory for tpu_custom_call.1']
    #allocation5 [shape = 'u8[16384]{0}', space=vmem, size = 0x4000, scoped, tag = 'input window, operand 1, single buffered']
    #allocation6 [shape = 's32[1]{0}', space=sflag, size = 0x4, scoped, tag = 'scoped memory for tpu_custom_call.1']
    #allocation7 [shape = 'u8[16384]{0}', space=vmem, size = 0x4000, scoped, tag = 'input window, operand 2, single buffered']
    #allocation8 [shape = 'u8[4096]{0}', space=vmem, size = 0x1000, scoped, tag = 'input window, operand 3, single buffered']
    #allocation9 [shape = 's32[1]{0}', space=sflag, size = 0x4, scoped, tag = 'scoped memory for tpu_custom_call.1']
    #allocation10 [shape = 'u8[32768]{0}', space=vmem, size = 0x8000, scoped, tag = 'input window, operand 4, single buffered']
    #allocation11 [shape = 'u8[32768]{0}', space=vmem, size = 0x8000, scoped, tag = 'input window, operand 6, single buffered']
    #allocation12 [shape = 's32[1]{0}', space=sflag, size = 0x4, scoped, tag = 'scoped memory for tpu_custom_call.1']
    #allocation13 [shape = 'u8[32768]{0}', space=vmem, size = 0x8000, scoped, tag = 'input window, operand 8, single buffered']
    #allocation14 [shape = 'u8[32768]{0}', space=vmem, size = 0x8000, scoped, tag = 'input window, operand 10, single buffered']
    #allocation15 [shape = 's32[1]{0}', space=sflag, size = 0x4, scoped, tag = 'scoped memory for tpu_custom_call.1']
    #allocation16 [shape = 'u8[16384]{0}', space=vmem, size = 0x4000, scoped, tag = 'output window, operand 0, single buffered']
    %17 = vsyncpa [#allocation3], 0
    %18 = vsyncpa [#allocation6], 0
    %19 = vsyncpa [#allocation9], 0
    %20 = vsyncpa [#allocation12], 0
    %21 = vsyncpa [#allocation15], 0
    %22 = vsyncpa [#allocation4], 0
    // Predicated region
    $region2: #{tpu_custom_call.1} parent=1 // pred_check
      _
    $region3: #{tpu_custom_call.1} parent=1 // pred_check_branch
      %24 = sbr.rel (0) target = $region5
    $region4: #{tpu_custom_call.1} parent=1 // pred_region
      %26 = vsyncadd [#allocation3], 0
      %s27 = sshll.u32 %s0, 4
      %s28 = int_to_ptr.hbm [resolvable:$true] %s27
      %s29 = sshll.u32 [#allocation2], 4
      %s30 = int_to_ptr.vmem [resolvable:$true] %s29
      %35 = dma.hbm_to_vmem [thread:$0]  %s28, 512, %s30, [#allocation3], 128, 128, 8
    $region5: #{tpu_custom_call.1} parent=1 // pred_fallthru
      _
    // Predicated region
    $region6: #{tpu_custom_call.1} parent=1 // pred_check
      _
    $region7: #{tpu_custom_call.1} parent=1 // pred_check_branch
      %37 = sbr.rel (0) target = $region9
    $region8: #{tpu_custom_call.1} parent=1 // pred_region
      %39 = vsyncadd [#allocation6], 0
      %s40 = sshll.u32 %s1, 4
      %s41 = int_to_ptr.hbm [resolvable:$true] %s40
      %s42 = sshll.u32 [#allocation5], 4
      %s43 = int_to_ptr.vmem [resolvable:$true] %s42
      %48 = dma.hbm_to_vmem [thread:$0]  %s41, 512, %s43, [#allocation6], 128, 128, 8
    $region9: #{tpu_custom_call.1} parent=1 // pred_fallthru
      _
    // Predicated region
    $region10: #{tpu_custom_call.1} parent=1 // pred_check
      _
    $region11: #{tpu_custom_call.1} parent=1 // pred_check_branch
      %50 = sbr.rel (0) target = $region13
    $region12: #{tpu_custom_call.1} parent=1 // pred_region
      %52 = vsyncadd [#allocation6], 0
      %s53 = sshll.u32 %s2, 4
      %s54 = int_to_ptr.hbm [resolvable:$true] %s53
      %s55 = sshll.u32 [#allocation7], 4
      %s56 = int_to_ptr.vmem [resolvable:$true] %s55
      %61 = dma.hbm_to_vmem [thread:$0]  %s54, 512, %s56, [#allocation6], 128, 128, 8
    $region13: #{tpu_custom_call.1} parent=1 // pred_fallthru
      _
    // Predicated region
    $region14: #{tpu_custom_call.1} parent=1 // pred_check
      _
    $region15: #{tpu_custom_call.1} parent=1 // pred_check_branch
      %63 = sbr.rel (0) target = $region17
    $region16: #{tpu_custom_call.1} parent=1 // pred_region
      %65 = vsyncadd [#allocation9], 0
      %s66 = sshll.u32 %s3, 4
      %s67 = int_to_ptr.hbm [resolvable:$true] %s66
      %s68 = sshll.u32 [#allocation8], 4
      %s69 = int_to_ptr.vmem [resolvable:$true] %s68
      %74 = dma.hbm_to_vmem [thread:$0]  %s67, 128, %s69, [#allocation9], 32, 32, 2
    $region17: #{tpu_custom_call.1} parent=1 // pred_fallthru
      _
    // Predicated region
    $region18: #{tpu_custom_call.1} parent=1 // pred_check
      _
    $region19: #{tpu_custom_call.1} parent=1 // pred_check_branch
      %76 = sbr.rel (0) target = $region21
    $region20: #{tpu_custom_call.1} parent=1 // pred_region
      %78 = vsyncadd [#allocation9], 0
      %s79 = sshll.u32 %s4, 4
      %s80 = int_to_ptr.hbm [resolvable:$true] %s79
      %s81 = sshll.u32 [#allocation10], 4
      %s82 = int_to_ptr.vmem [resolvable:$true] %s81
      %87 = dma.hbm_to_vmem [thread:$0]  %s80, 1024, %s82, [#allocation9], 64, 64, 4
    $region21: #{tpu_custom_call.1} parent=1 // pred_fallthru
      _
    // Predicated region
    $region22: #{tpu_custom_call.1} parent=1 // pred_check
      _
    $region23: #{tpu_custom_call.1} parent=1 // pred_check_branch
      %89 = sbr.rel (0) target = $region25
    $region24: #{tpu_custom_call.1} parent=1 // pred_region
      _
    $region25: #{tpu_custom_call.1} parent=1 // pred_fallthru
      _
    // Predicated region
    $region26: #{tpu_custom_call.1} parent=1 // pred_check
      _
    $region27: #{tpu_custom_call.1} parent=1 // pred_check_branch
      %91 = sbr.rel (0) target = $region29
    $region28: #{tpu_custom_call.1} parent=1 // pred_region
      %93 = vsyncadd [#allocation12], 0
      %s94 = sshll.u32 %s6, 4
      %s95 = int_to_ptr.hbm [resolvable:$true] %s94
      %s96 = sshll.u32 [#allocation11], 4
      %s97 = int_to_ptr.vmem [resolvable:$true] %s96
      %102 = dma.hbm_to_vmem [thread:$0]  %s95, 1024, %s97, [#allocation12], 64, 64, 4
    $region29: #{tpu_custom_call.1} parent=1 // pred_fallthru
      _
    // Predicated region
    $region30: #{tpu_custom_call.1} parent=1 // pred_check
      _
    $region31: #{tpu_custom_call.1} parent=1 // pred_check_branch
      %104 = sbr.rel (0) target = $region33
    $region32: #{tpu_custom_call.1} parent=1 // pred_region
      _
    $region33: #{tpu_custom_call.1} parent=1 // pred_fallthru
      _
    // Predicated region
    $region34: #{tpu_custom_call.1} parent=1 // pred_check
      _
    $region35: #{tpu_custom_call.1} parent=1 // pred_check_branch
      %106 = sbr.rel (0) target = $region37
    $region36: #{tpu_custom_call.1} parent=1 // pred_region
      %108 = vsyncadd [#allocation12], 0
      %s109 = sshll.u32 %s8, 4
      %s110 = int_to_ptr.hbm [resolvable:$true] %s109
      %s111 = sshll.u32 [#allocation13], 4
      %s112 = int_to_ptr.vmem [resolvable:$true] %s111
      %117 = dma.hbm_to_vmem [thread:$0]  %s110, 1024, %s112, [#allocation12], 64, 64, 4
    $region37: #{tpu_custom_call.1} parent=1 // pred_fallthru
      _
    // Predicated region
    $region38: #{tpu_custom_call.1} parent=1 // pred_check
      _
    $region39: #{tpu_custom_call.1} parent=1 // pred_check_branch
      %119 = sbr.rel (0) target = $region41
    $region40: #{tpu_custom_call.1} parent=1 // pred_region
      _
    $region41: #{tpu_custom_call.1} parent=1 // pred_fallthru
      _
    // Predicated region
    $region42: #{tpu_custom_call.1} parent=1 // pred_check
      _
    $region43: #{tpu_custom_call.1} parent=1 // pred_check_branch
      %121 = sbr.rel (0) target = $region45
    $region44: #{tpu_custom_call.1} parent=1 // pred_region
      %123 = vsyncadd [#allocation15], 0
      %s124 = sshll.u32 %s10, 4
      %s125 = int_to_ptr.hbm [resolvable:$true] %s124
      %s126 = sshll.u32 [#allocation14], 4
      %s127 = int_to_ptr.vmem [resolvable:$true] %s126
      %132 = dma.hbm_to_vmem [thread:$0]  %s125, 1024, %s127, [#allocation15], 64, 64, 4
    $region45: #{tpu_custom_call.1} parent=1 // pred_fallthru
      _
    // Predicated region
    $region46: #{tpu_custom_call.1} parent=1 // pred_check
      _
    $region47: #{tpu_custom_call.1} parent=1 // pred_check_branch
      %134 = sbr.rel (0) target = $region49
    $region48: #{tpu_custom_call.1} parent=1 // pred_region
      _
    $region49: #{tpu_custom_call.1} parent=1 // pred_fallthru
      _
    // Predicated region
    $region50: #{tpu_custom_call.1} parent=1 // pred_check
      _
    $region51: #{tpu_custom_call.1} parent=1 // pred_check_branch
      %136 = sbr.rel (0) target = $region53
    $region52: #{tpu_custom_call.1} parent=1 // pred_region
      %138 = dma.done [#allocation3], 512
    $region53: #{tpu_custom_call.1} parent=1 // pred_fallthru
      _
    // Predicated region
    $region54: #{tpu_custom_call.1} parent=1 // pred_check
      _
    $region55: #{tpu_custom_call.1} parent=1 // pred_check_branch
      %140 = sbr.rel (0) target = $region57
    $region56: #{tpu_custom_call.1} parent=1 // pred_region
      %142 = dma.done [#allocation6], 512
    $region57: #{tpu_custom_call.1} parent=1 // pred_fallthru
      _
    // Predicated region
    $region58: #{tpu_custom_call.1} parent=1 // pred_check
      _
    $region59: #{tpu_custom_call.1} parent=1 // pred_check_branch
      %144 = sbr.rel (0) target = $region61
    $region60: #{tpu_custom_call.1} parent=1 // pred_region
      %146 = dma.done [#allocation6], 512
    $region61: #{tpu_custom_call.1} parent=1 // pred_fallthru
      _
    // Predicated region
    $region62: #{tpu_custom_call.1} parent=1 // pred_check
      _
    $region63: #{tpu_custom_call.1} parent=1 // pred_check_branch
      %148 = sbr.rel (0) target = $region65
    $region64: #{tpu_custom_call.1} parent=1 // pred_region
      %150 = dma.done [#allocation9], 128
    $region65: #{tpu_custom_call.1} parent=1 // pred_fallthru
      _
    // Predicated region
    $region66: #{tpu_custom_call.1} parent=1 // pred_check
      _
    $region67: #{tpu_custom_call.1} parent=1 // pred_check_branch
      %152 = sbr.rel (0) target = $region69
    $region68: #{tpu_custom_call.1} parent=1 // pred_region
      %154 = dma.done [#allocation9], 1024
    $region69: #{tpu_custom_call.1} parent=1 // pred_fallthru
      _
    // Predicated region
    $region70: #{tpu_custom_call.1} parent=1 // pred_check
      _
    $region71: #{tpu_custom_call.1} parent=1 // pred_check_branch
      %156 = sbr.rel (0) target = $region73
    $region72: #{tpu_custom_call.1} parent=1 // pred_region
      %158 = dma.done [#allocation12], 1024
    $region73: #{tpu_custom_call.1} parent=1 // pred_fallthru
      _
    // Predicated region
    $region74: #{tpu_custom_call.1} parent=1 // pred_check
      _
    $region75: #{tpu_custom_call.1} parent=1 // pred_check_branch
      %160 = sbr.rel (0) target = $region77
    $region76: #{tpu_custom_call.1} parent=1 // pred_region
      %162 = dma.done [#allocation12], 1024
    $region77: #{tpu_custom_call.1} parent=1 // pred_fallthru
      _
    // Predicated region
    $region78: #{tpu_custom_call.1} parent=1 // pred_check
      _
    $region79: #{tpu_custom_call.1} parent=1 // pred_check_branch
      %164 = sbr.rel (0) target = $region81
    $region80: #{tpu_custom_call.1} parent=1 // pred_region
      %166 = dma.done [#allocation15], 1024
    $region81: #{tpu_custom_call.1} parent=1 // pred_fallthru
      _
    %v170 = vld [vmem:[#allocation2] sm:$0xff]
    %v171 = vld [vmem:[#allocation2 + $0x8] sm:$0xff]
    %v172 = vld [vmem:[#allocation2 + $0x10] sm:$0xff]
    %v173 = vld [vmem:[#allocation2 + $0x18] sm:$0xff]
    %v174 = vpack.c.bf16 %v171, %v170
    %v175 = vpack.c.bf16 %v173, %v172
    %v176 = vld [vmem:[#allocation5] sm:$0xff]
    %v177 = vld [vmem:[#allocation5 + $0x8] sm:$0xff]
    %v178 = vld [vmem:[#allocation5 + $0x10] sm:$0xff]
    %v179 = vld [vmem:[#allocation5 + $0x18] sm:$0xff]
    %v180 = vpack.c.bf16 %v177, %v176
    %v181 = vpack.c.bf16 %v179, %v178
    %v182 = vld [vmem:[#allocation7] sm:$0xff]
    %v183 = vld [vmem:[#allocation7 + $0x8] sm:$0xff]
    %v184 = vld [vmem:[#allocation7 + $0x10] sm:$0xff]
    %v185 = vld [vmem:[#allocation7 + $0x18] sm:$0xff]
    %v186 = vpack.c.bf16 %v183, %v182
    %v187 = vpack.c.bf16 %v185, %v184
    %v188 = vld [vmem:[#allocation10] sm:$0xf]
    %v189 = vld [vmem:[#allocation10 + $0x4] sm:$0xf]
    %v190 = vld [vmem:[#allocation10 + $0x8] sm:$0xf]
    %v191 = vld [vmem:[#allocation10 + $0xc] sm:$0xf]
    %v192 = vld [vmem:[#allocation10 + $0x10] sm:$0xf]
    %v193 = vld [vmem:[#allocation10 + $0x14] sm:$0xf]
    %v194 = vld [vmem:[#allocation10 + $0x18] sm:$0xf]
    %v195 = vld [vmem:[#allocation10 + $0x1c] sm:$0xf]
    %v196 = vld [vmem:[#allocation10 + $0x20] sm:$0xf]
    %v197 = vld [vmem:[#allocation10 + $0x24] sm:$0xf]
    %v198 = vld [vmem:[#allocation10 + $0x28] sm:$0xf]
    %v199 = vld [vmem:[#allocation10 + $0x2c] sm:$0xf]
    %v200 = vld [vmem:[#allocation10 + $0x30] sm:$0xf]
    %v201 = vld [vmem:[#allocation10 + $0x34] sm:$0xf]
    %v202 = vld [vmem:[#allocation10 + $0x38] sm:$0xf]
    %v203 = vld [vmem:[#allocation10 + $0x3c] sm:$0xf]
    %v204 = vld [vmem:[#allocation11] sm:$0xf]
    %v205 = vld [vmem:[#allocation11 + $0x4] sm:$0xf]
    %v206 = vld [vmem:[#allocation11 + $0x8] sm:$0xf]
    %v207 = vld [vmem:[#allocation11 + $0xc] sm:$0xf]
    %v208 = vld [vmem:[#allocation11 + $0x10] sm:$0xf]
    %v209 = vld [vmem:[#allocation11 + $0x14] sm:$0xf]
    %v210 = vld [vmem:[#allocation11 + $0x18] sm:$0xf]
    %v211 = vld [vmem:[#allocation11 + $0x1c] sm:$0xf]
    %v212 = vld [vmem:[#allocation11 + $0x20] sm:$0xf]
    %v213 = vld [vmem:[#allocation11 + $0x24] sm:$0xf]
    %v214 = vld [vmem:[#allocation11 + $0x28] sm:$0xf]
    %v215 = vld [vmem:[#allocation11 + $0x2c] sm:$0xf]
    %v216 = vld [vmem:[#allocation11 + $0x30] sm:$0xf]
    %v217 = vld [vmem:[#allocation11 + $0x34] sm:$0xf]
    %v218 = vld [vmem:[#allocation11 + $0x38] sm:$0xf]
    %v219 = vld [vmem:[#allocation11 + $0x3c] sm:$0xf]
    %v220 = vld [vmem:[#allocation13] sm:$0xf]
    %v221 = vld [vmem:[#allocation13 + $0x4] sm:$0xf]
    %v222 = vld [vmem:[#allocation13 + $0x8] sm:$0xf]
    %v223 = vld [vmem:[#allocation13 + $0xc] sm:$0xf]
    %v224 = vld [vmem:[#allocation13 + $0x10] sm:$0xf]
    %v225 = vld [vmem:[#allocation13 + $0x14] sm:$0xf]
    %v226 = vld [vmem:[#allocation13 + $0x18] sm:$0xf]
    %v227 = vld [vmem:[#allocation13 + $0x1c] sm:$0xf]
    %v228 = vld [vmem:[#allocation13 + $0x20] sm:$0xf]
    %v229 = vld [vmem:[#allocation13 + $0x24] sm:$0xf]
    %v230 = vld [vmem:[#allocation13 + $0x28] sm:$0xf]
    %v231 = vld [vmem:[#allocation13 + $0x2c] sm:$0xf]
    %v232 = vld [vmem:[#allocation13 + $0x30] sm:$0xf]
    %v233 = vld [vmem:[#allocation13 + $0x34] sm:$0xf]
    %v234 = vld [vmem:[#allocation13 + $0x38] sm:$0xf]
    %v235 = vld [vmem:[#allocation13 + $0x3c] sm:$0xf]
    %v236 = vld [vmem:[#allocation14] sm:$0xf]
    %v237 = vld [vmem:[#allocation14 + $0x4] sm:$0xf]
    %v238 = vld [vmem:[#allocation14 + $0x8] sm:$0xf]
    %v239 = vld [vmem:[#allocation14 + $0xc] sm:$0xf]
    %v240 = vld [vmem:[#allocation14 + $0x10] sm:$0xf]
    %v241 = vld [vmem:[#allocation14 + $0x14] sm:$0xf]
    %v242 = vld [vmem:[#allocation14 + $0x18] sm:$0xf]
    %v243 = vld [vmem:[#allocation14 + $0x1c] sm:$0xf]
    %v244 = vld [vmem:[#allocation14 + $0x20] sm:$0xf]
    %v245 = vld [vmem:[#allocation14 + $0x24] sm:$0xf]
    %v246 = vld [vmem:[#allocation14 + $0x28] sm:$0xf]
    %v247 = vld [vmem:[#allocation14 + $0x2c] sm:$0xf]
    %v248 = vld [vmem:[#allocation14 + $0x30] sm:$0xf]
    %v249 = vld [vmem:[#allocation14 + $0x34] sm:$0xf]
    %v250 = vld [vmem:[#allocation14 + $0x38] sm:$0xf]
    %v251 = vld [vmem:[#allocation14 + $0x3c] sm:$0xf]
    %v252 = vld [vmem:[%s5] sm:$0x1]
    %v254 = vperm.slane %v252, 0
    %v272 = vunpack.c.l.b16 %v188
    %v273 = vunpack.c.l.b16 %v189
    %v274 = vunpack.c.l.b16 %v190
    %v275 = vunpack.c.l.b16 %v191
    %v276 = vunpack.c.l.b16 %v192
    %v277 = vunpack.c.l.b16 %v193
    %v278 = vunpack.c.l.b16 %v194
    %v279 = vunpack.c.l.b16 %v195
    %v280 = vunpack.c.l.b16 %v196
    %v281 = vunpack.c.l.b16 %v197
    %v282 = vunpack.c.l.b16 %v198
    %v283 = vunpack.c.l.b16 %v199
    %v284 = vunpack.c.l.b16 %v200
    %v285 = vunpack.c.l.b16 %v201
    %v286 = vunpack.c.l.b16 %v202
    %v287 = vunpack.c.l.b16 %v203
    %v288 = vpack.c.b16 %v273, %v272
    %v289 = vpack.c.b16 %v275, %v274
    %v290 = vpack.c.b16 %v277, %v276
    %v291 = vpack.c.b16 %v279, %v278
    %v292 = vpack.c.b16 %v281, %v280
    %v293 = vpack.c.b16 %v283, %v282
    %v294 = vpack.c.b16 %v285, %v284
    %v295 = vpack.c.b16 %v287, %v286
    %304 = vmatpush.bf16.msra.mxu0 %v295
    %305 = vmatpush.bf16.msra.mxu0 %v294
    %306 = vmatpush.bf16.msra.mxu0 %v293
    %307 = vmatpush.bf16.msra.mxu0 %v292
    %308 = vmatpush.bf16.msra.mxu0 %v291
    %309 = vmatpush.bf16.msra.mxu0 %v290
    %310 = vmatpush.bf16.msra.mxu0 %v289
    %311 = vmatpush.bf16.msra.mxu0 %v288
    %312 = vmatmul.bf16.gmra.mxu0 %v174
    %v313 = vpop.f32.mrf.mxu0
    %v314 = vadd.f32 %v254, %v313
    %v315 = vpop.f32.mrf.mxu0
    %v316 = vadd.f32 %v254, %v315
    %317 = vmatmul.bf16.gmra.mxu0 %v175
    %v318 = vpop.f32.mrf.mxu0
    %v319 = vadd.f32 %v254, %v318
    %v320 = vpop.f32.mrf.mxu0
    %v321 = vadd.f32 %v254, %v320
    %322 = vdwg.mxu0
    %v323 = vmul.f32 %v314, 0.17677669
    %v324 = vmul.f32 %v316, 0.17677669
    %v325 = vmul.f32 %v319, 0.17677669
    %v326 = vmul.f32 %v321, 0.17677669
    %v327 = vpack.c.bf16 %v323, %v323
    %v328 = vpack.c.bf16 %v324, %v324
    %v329 = vpack.c.bf16 %v325, %v325
    %v330 = vpack.c.bf16 %v326, %v326
    %v331 = vld [vmem:[%s7] sm:$0x1]
    %v333 = vperm.slane %v331, 0
    %v351 = vunpack.c.l.b16 %v204
    %v352 = vunpack.c.l.b16 %v205
    %v353 = vunpack.c.l.b16 %v206
    %v354 = vunpack.c.l.b16 %v207
    %v355 = vunpack.c.l.b16 %v208
    %v356 = vunpack.c.l.b16 %v209
    %v357 = vunpack.c.l.b16 %v210
    %v358 = vunpack.c.l.b16 %v211
    %v359 = vunpack.c.l.b16 %v212
    %v360 = vunpack.c.l.b16 %v213
    %v361 = vunpack.c.l.b16 %v214
    %v362 = vunpack.c.l.b16 %v215
    %v363 = vunpack.c.l.b16 %v216
    %v364 = vunpack.c.l.b16 %v217
    %v365 = vunpack.c.l.b16 %v218
    %v366 = vunpack.c.l.b16 %v219
    %v367 = vpack.c.b16 %v352, %v351
    %v368 = vpack.c.b16 %v354, %v353
    %v369 = vpack.c.b16 %v356, %v355
    %v370 = vpack.c.b16 %v358, %v357
    %v371 = vpack.c.b16 %v360, %v359
    %v372 = vpack.c.b16 %v362, %v361
    %v373 = vpack.c.b16 %v364, %v363
    %v374 = vpack.c.b16 %v366, %v365
    %383 = vmatpush.bf16.msra.mxu0 %v374
    %384 = vmatpush.bf16.msra.mxu0 %v373
    %385 = vmatpush.bf16.msra.mxu0 %v372
    %386 = vmatpush.bf16.msra.mxu0 %v371
    %387 = vmatpush.bf16.msra.mxu0 %v370
    %388 = vmatpush.bf16.msra.mxu0 %v369
    %389 = vmatpush.bf16.msra.mxu0 %v368
    %390 = vmatpush.bf16.msra.mxu0 %v367
    %391 = vmatmul.bf16.gmra.mxu0 %v180
    %v392 = vpop.f32.mrf.mxu0
    %v393 = vadd.f32 %v333, %v392
    %v394 = vpop.f32.mrf.mxu0
    %v395 = vadd.f32 %v333, %v394
    %396 = vmatmul.bf16.gmra.mxu0 %v181
    %v397 = vpop.f32.mrf.mxu0
    %v398 = vadd.f32 %v333, %v397
    %v399 = vpop.f32.mrf.mxu0
    %v400 = vadd.f32 %v333, %v399
    %401 = vdwg.mxu0
    %v402 = vpack.c.bf16 %v393, %v393
    %v403 = vpack.c.bf16 %v395, %v395
    %v404 = vpack.c.bf16 %v398, %v398
    %v405 = vpack.c.bf16 %v400, %v400
    %v406 = vld [vmem:[%s9] sm:$0x1]
    %v408 = vperm.slane %v406, 0
    %v426 = vunpack.c.l.b16 %v220
    %v427 = vunpack.c.l.b16 %v221
    %v428 = vunpack.c.l.b16 %v222
    %v429 = vunpack.c.l.b16 %v223
    %v430 = vunpack.c.l.b16 %v224
    %v431 = vunpack.c.l.b16 %v225
    %v432 = vunpack.c.l.b16 %v226
    %v433 = vunpack.c.l.b16 %v227
    %v434 = vunpack.c.l.b16 %v228
    %v435 = vunpack.c.l.b16 %v229
    %v436 = vunpack.c.l.b16 %v230
    %v437 = vunpack.c.l.b16 %v231
    %v438 = vunpack.c.l.b16 %v232
    %v439 = vunpack.c.l.b16 %v233
    %v440 = vunpack.c.l.b16 %v234
    %v441 = vunpack.c.l.b16 %v235
    %v442 = vpack.c.b16 %v427, %v426
    %v443 = vpack.c.b16 %v429, %v428
    %v444 = vpack.c.b16 %v431, %v430
    %v445 = vpack.c.b16 %v433, %v432
    %v446 = vpack.c.b16 %v435, %v434
    %v447 = vpack.c.b16 %v437, %v436
    %v448 = vpack.c.b16 %v439, %v438
    %v449 = vpack.c.b16 %v441, %v440
    %458 = vmatpush.bf16.msra.mxu0 %v449
    %459 = vmatpush.bf16.msra.mxu0 %v448
    %460 = vmatpush.bf16.msra.mxu0 %v447
    %461 = vmatpush.bf16.msra.mxu0 %v446
    %462 = vmatpush.bf16.msra.mxu0 %v445
    %463 = vmatpush.bf16.msra.mxu0 %v444
    %464 = vmatpush.bf16.msra.mxu0 %v443
    %465 = vmatpush.bf16.msra.mxu0 %v442
    %466 = vmatmul.bf16.gmra.mxu0 %v186
    %v467 = vpop.f32.mrf.mxu0
    %v468 = vadd.f32 %v408, %v467
    %v469 = vpop.f32.mrf.mxu0
    %v470 = vadd.f32 %v408, %v469
    %471 = vmatmul.bf16.gmra.mxu0 %v187
    %v472 = vpop.f32.mrf.mxu0
    %v473 = vadd.f32 %v408, %v472
    %v474 = vpop.f32.mrf.mxu0
    %v475 = vadd.f32 %v408, %v474
    %476 = vdwg.mxu0
    %v477 = vpack.c.bf16 %v468, %v468
    %v478 = vpack.c.bf16 %v470, %v470
    %v479 = vpack.c.bf16 %v473, %v473
    %v480 = vpack.c.bf16 %v475, %v475
    %v481 = vld [vmem:[%s11] sm:$0x1]
    %v482 = vld [vmem:[#allocation8] sm:$0x3]
    %v483 = vld [vmem:[#allocation8 + $0x2] sm:$0x3]
    %vm484 = vnez %v482
    %vm485 = vnez %v483
    %v488 = vunpack.c.l.b16 %v327
    %v489 = vunpack.c.l.b16 %v328
    %v490 = vpack.c.b16 %v489, %v488
    %v493 = vunpack.c.l.b16 %v402
    %v494 = vunpack.c.l.b16 %v403
    %v495 = vpack.c.b16 %v494, %v493
    %vm496 = vcmask 261120
    %v498 = vsel %vm496, %v490, 0
    %v501 = vsel %vm496, %v495, 0
    %503 = vmatpush.bf16.xpose.msra.mxu0 0
    %504 = vmatpush.bf16.xpose.msra.mxu0 0
    %505 = vmatpush.bf16.xpose.msra.mxu0 0
    %506 = vmatpush.bf16.xpose.msra.mxu0 0
    %507 = vmatpush.bf16.xpose.msra.mxu0 0
    %508 = vmatpush.bf16.xpose.msra.mxu0 0
    %509 = vmatpush.bf16.xpose.msra.mxu0 0
    %510 = vmatpush.bf16.xpose.msra.mxu0 %v501
    %511 = vmatmul.bf16.gmra.mxu0 %v498
    %v512 = vpop.f32.mrf.mxu0
    %v513 = vadd.f32 0.0, %v512
    %v514 = vpop.f32.mrf.mxu0
    %v515 = vadd.f32 0.0, %v514
    %516 = vdwg.mxu0
    %v517 = vsel %vm484, 16843009, 0
    %v518 = vsel %vm485, 16843009, 0
    %v519 = vunpack.c.0.s8 %v517
    %v520 = vunpack.c.0.s8 %v518
    %vm521 = vcmp.ne.s32.totalorder %v519, 0
    %vm522 = vcmp.ne.s32.totalorder %v520, 0
    %v523 = vsel %vm521, %v513, -1e+10
    %v524 = vsel %vm522, %v515, -1e+10
    %vm525 = vcmask 130048
    %v526 = vsel %vm525, %v523, -inf
    %527 = vmax.xlane.f32.xlu0 %v526
    %v528 = vpop.xlane.xlu0 %527
    %v529 = vsel %vm525, %v524, -inf
    %530 = vmax.xlane.f32.xlu0 %v529
    %v531 = vpop.xlane.xlu0 %530
    %v532 = vsub.f32 %v523, %v528
    %v533 = vsub.f32 %v524, %v531
    %v534 = vmul.f32 %v532, 1.442695
    %v535 = vpow.pop %v534
    %v536 = vmul.f32 %v533, 1.442695
    %v537 = vpow.pop %v536
    %v538 = vsel %vm525, %v535, 0.0
    %539 = vadd.xlane.f32.xlu0 %v538
    %v540 = vpop.xlane.xlu0 %539
    %v541 = vsel %vm525, %v537, 0.0
    %542 = vadd.xlane.f32.xlu0 %v541
    %v543 = vpop.xlane.xlu0 %542
    %v544 = vrcp.pop %v540
    %v545 = vrcp.pop %v543
    %v546 = vmul.f32 %v535, %v544
    %v547 = vmul.f32 %v537, %v545
    %v548 = vpack.c.bf16 %v547, %v546
    %v551 = vunpack.c.l.b16 %v477
    %v552 = vunpack.c.l.b16 %v478
    %v553 = vpack.c.b16 %v552, %v551
    %v556 = vsel %vm525, %v548, 0
    %558 = vmatpush.bf16.msra.mxu0 0
    %559 = vmatpush.bf16.msra.mxu0 0
    %560 = vmatpush.bf16.msra.mxu0 0
    %561 = vmatpush.bf16.msra.mxu0 0
    %562 = vmatpush.bf16.msra.mxu0 0
    %563 = vmatpush.bf16.msra.mxu0 0
    %564 = vmatpush.bf16.msra.mxu0 0
    %565 = vmatpush.bf16.msra.mxu0 %v553
    %566 = vmatmul.bf16.gmra.mxu0 %v556
    %v567 = vpop.f32.mrf.mxu0
    %v568 = vadd.f32 0.0, %v567
    %v569 = vpop.f32.mrf.mxu0
    %v570 = vadd.f32 0.0, %v569
    %571 = vdwg.mxu0
    %v572 = vpack.c.bf16 %v570, %v568
    %573 = vrot.lane.b32.xlu0 %v490, 96
    %v574 = vpop.permute.xlu0 %573
    %575 = vrot.lane.b32.xlu0 %v495, 96
    %v576 = vpop.permute.xlu0 %575
    %v578 = vsel %vm496, %v574, 0
    %v581 = vsel %vm496, %v576, 0
    %583 = vmatpush.bf16.xpose.msra.mxu0 0
    %584 = vmatpush.bf16.xpose.msra.mxu0 0
    %585 = vmatpush.bf16.xpose.msra.mxu0 0
    %586 = vmatpush.bf16.xpose.msra.mxu0 0
    %587 = vmatpush.bf16.xpose.msra.mxu0 0
    %588 = vmatpush.bf16.xpose.msra.mxu0 0
    %589 = vmatpush.bf16.xpose.msra.mxu0 0
    %590 = vmatpush.bf16.xpose.msra.mxu0 %v581
    %591 = vmatmul.bf16.gmra.mxu0 %v578
    %v592 = vpop.f32.mrf.mxu0
    %v593 = vadd.f32 0.0, %v592
    %v594 = vpop.f32.mrf.mxu0
    %v595 = vadd.f32 0.0, %v594
    %596 = vdwg.mxu0
    %v597 = vsel %vm521, %v593, -1e+10
    %v598 = vsel %vm522, %v595, -1e+10
    %v599 = vsel %vm525, %v597, -inf
    %600 = vmax.xlane.f32.xlu0 %v599
    %v601 = vpop.xlane.xlu0 %600
    %v602 = vsel %vm525, %v598, -inf
    %603 = vmax.xlane.f32.xlu0 %v602
    %v604 = vpop.xlane.xlu0 %603
    %v605 = vsub.f32 %v597, %v601
    %v606 = vsub.f32 %v598, %v604
    %v607 = vmul.f32 %v605, 1.442695
    %v608 = vpow.pop %v607
    %v609 = vmul.f32 %v606, 1.442695
    %v610 = vpow.pop %v609
    %v611 = vsel %vm525, %v608, 0.0
    %612 = vadd.xlane.f32.xlu0 %v611
    %v613 = vpop.xlane.xlu0 %612
    %v614 = vsel %vm525, %v610, 0.0
    %615 = vadd.xlane.f32.xlu0 %v614
    %v616 = vpop.xlane.xlu0 %615
    %v617 = vrcp.pop %v613
    %v618 = vrcp.pop %v616
    %v619 = vmul.f32 %v608, %v617
    %v620 = vmul.f32 %v610, %v618
    %v621 = vpack.c.bf16 %v620, %v619
    %622 = vrot.lane.b32.xlu0 %v553, 96
    %v623 = vpop.permute.xlu0 %622
    %v626 = vsel %vm525, %v621, 0
    %628 = vmatpush.bf16.msra.mxu0 0
    %629 = vmatpush.bf16.msra.mxu0 0
    %630 = vmatpush.bf16.msra.mxu0 0
    %631 = vmatpush.bf16.msra.mxu0 0
    %632 = vmatpush.bf16.msra.mxu0 0
    %633 = vmatpush.bf16.msra.mxu0 0
    %634 = vmatpush.bf16.msra.mxu0 0
    %635 = vmatpush.bf16.msra.mxu0 %v623
    %636 = vmatmul.bf16.gmra.mxu0 %v626
    %v637 = vpop.f32.mrf.mxu0
    %v638 = vadd.f32 0.0, %v637
    %v639 = vpop.f32.mrf.mxu0
    %v640 = vadd.f32 0.0, %v639
    %641 = vdwg.mxu0
    %v642 = vpack.c.bf16 %v640, %v638
    %v647 = vunpack.c.l.b16 %v240
    %v648 = vunpack.c.l.b16 %v241
    %v649 = vunpack.c.l.b16 %v242
    %v650 = vunpack.c.l.b16 %v243
    %v651 = vpack.c.b16 %v648, %v647
    %v652 = vpack.c.b16 %v650, %v649
    %v656 = vsel %vm496, %v642, 0
    %658 = vmatpush.bf16.msra.mxu0 0
    %659 = vmatpush.bf16.msra.mxu0 0
    %660 = vmatpush.bf16.msra.mxu0 0
    %661 = vmatpush.bf16.msra.mxu0 0
    %662 = vmatpush.bf16.msra.mxu0 0
    %663 = vmatpush.bf16.msra.mxu0 0
    %664 = vmatpush.bf16.msra.mxu0 %v652
    %665 = vmatpush.bf16.msra.mxu0 %v651
    %666 = vmatmul.bf16.gmra.mxu0 %v656
    %v667 = vpop.f32.mrf.mxu0
    %v668 = vadd.f32 0.0, %v667
    %v669 = vpop.f32.mrf.mxu0
    %v670 = vadd.f32 0.0, %v669
    %671 = vdwg.mxu0
    %v676 = vunpack.c.l.b16 %v236
    %v677 = vunpack.c.l.b16 %v237
    %v678 = vunpack.c.l.b16 %v238
    %v679 = vunpack.c.l.b16 %v239
    %v680 = vpack.c.b16 %v677, %v676
    %v681 = vpack.c.b16 %v679, %v678
    %v685 = vsel %vm496, %v572, 0
    %687 = vmatpush.bf16.msra.mxu0 0
    %688 = vmatpush.bf16.msra.mxu0 0
    %689 = vmatpush.bf16.msra.mxu0 0
    %690 = vmatpush.bf16.msra.mxu0 0
    %691 = vmatpush.bf16.msra.mxu0 0
    %692 = vmatpush.bf16.msra.mxu0 0
    %693 = vmatpush.bf16.msra.mxu0 %v681
    %694 = vmatpush.bf16.msra.mxu0 %v680
    %695 = vmatmul.bf16.gmra.mxu0 %v685
    %v696 = vpop.f32.mrf.mxu0
    %v697 = vadd.f32 %v668, %v696
    %v698 = vpop.f32.mrf.mxu0
    %v699 = vadd.f32 %v670, %v698
    %700 = vdwg.mxu0
    %701 = vrot.lane.b32.xlu0 %v490, 64
    %v702 = vpop.permute.xlu0 %701
    %703 = vrot.lane.b32.xlu0 %v495, 64
    %v704 = vpop.permute.xlu0 %703
    %v706 = vsel %vm496, %v702, 0
    %v709 = vsel %vm496, %v704, 0
    %711 = vmatpush.bf16.xpose.msra.mxu0 0
    %712 = vmatpush.bf16.xpose.msra.mxu0 0
    %713 = vmatpush.bf16.xpose.msra.mxu0 0
    %714 = vmatpush.bf16.xpose.msra.mxu0 0
    %715 = vmatpush.bf16.xpose.msra.mxu0 0
    %716 = vmatpush.bf16.xpose.msra.mxu0 0
    %717 = vmatpush.bf16.xpose.msra.mxu0 0
    %718 = vmatpush.bf16.xpose.msra.mxu0 %v709
    %719 = vmatmul.bf16.gmra.mxu0 %v706
    %v720 = vpop.f32.mrf.mxu0
    %v721 = vadd.f32 0.0, %v720
    %v722 = vpop.f32.mrf.mxu0
    %v723 = vadd.f32 0.0, %v722
    %724 = vdwg.mxu0
    %v725 = vsel %vm521, %v721, -1e+10
    %v726 = vsel %vm522, %v723, -1e+10
    %v727 = vsel %vm525, %v725, -inf
    %728 = vmax.xlane.f32.xlu0 %v727
    %v729 = vpop.xlane.xlu0 %728
    %v730 = vsel %vm525, %v726, -inf
    %731 = vmax.xlane.f32.xlu0 %v730
    %v732 = vpop.xlane.xlu0 %731
    %v733 = vsub.f32 %v725, %v729
    %v734 = vsub.f32 %v726, %v732
    %v735 = vmul.f32 %v733, 1.442695
    %v736 = vpow.pop %v735
    %v737 = vmul.f32 %v734, 1.442695
    %v738 = vpow.pop %v737
    %v739 = vsel %vm525, %v736, 0.0
    %740 = vadd.xlane.f32.xlu0 %v739
    %v741 = vpop.xlane.xlu0 %740
    %v742 = vsel %vm525, %v738, 0.0
    %743 = vadd.xlane.f32.xlu0 %v742
    %v744 = vpop.xlane.xlu0 %743
    %v745 = vrcp.pop %v741
    %v746 = vrcp.pop %v744
    %v747 = vmul.f32 %v736, %v745
    %v748 = vmul.f32 %v738, %v746
    %v749 = vpack.c.bf16 %v748, %v747
    %750 = vrot.lane.b32.xlu0 %v553, 64
    %v751 = vpop.permute.xlu0 %750
    %v754 = vsel %vm525, %v749, 0
    %756 = vmatpush.bf16.msra.mxu0 0
    %757 = vmatpush.bf16.msra.mxu0 0
    %758 = vmatpush.bf16.msra.mxu0 0
    %759 = vmatpush.bf16.msra.mxu0 0
    %760 = vmatpush.bf16.msra.mxu0 0
    %761 = vmatpush.bf16.msra.mxu0 0
    %762 = vmatpush.bf16.msra.mxu0 0
    %763 = vmatpush.bf16.msra.mxu0 %v751
    %764 = vmatmul.bf16.gmra.mxu0 %v754
    %v765 = vpop.f32.mrf.mxu0
    %v766 = vadd.f32 0.0, %v765
    %v767 = vpop.f32.mrf.mxu0
    %v768 = vadd.f32 0.0, %v767
    %769 = vdwg.mxu0
    %v770 = vpack.c.bf16 %v768, %v766
    %v775 = vunpack.c.l.b16 %v244
    %v776 = vunpack.c.l.b16 %v245
    %v777 = vunpack.c.l.b16 %v246
    %v778 = vunpack.c.l.b16 %v247
    %v779 = vpack.c.b16 %v776, %v775
    %v780 = vpack.c.b16 %v778, %v777
    %v784 = vsel %vm496, %v770, 0
    %786 = vmatpush.bf16.msra.mxu0 0
    %787 = vmatpush.bf16.msra.mxu0 0
    %788 = vmatpush.bf16.msra.mxu0 0
    %789 = vmatpush.bf16.msra.mxu0 0
    %790 = vmatpush.bf16.msra.mxu0 0
    %791 = vmatpush.bf16.msra.mxu0 0
    %792 = vmatpush.bf16.msra.mxu0 %v780
    %793 = vmatpush.bf16.msra.mxu0 %v779
    %794 = vmatmul.bf16.gmra.mxu0 %v784
    %v795 = vpop.f32.mrf.mxu0
    %v796 = vadd.f32 0.0, %v795
    %v797 = vpop.f32.mrf.mxu0
    %v798 = vadd.f32 0.0, %v797
    %799 = vdwg.mxu0
    %v800 = vadd.f32 %v697, %v796
    %v801 = vadd.f32 %v699, %v798
    %802 = vrot.lane.b32.xlu0 %v490, 32
    %v803 = vpop.permute.xlu0 %802
    %804 = vrot.lane.b32.xlu0 %v495, 32
    %v805 = vpop.permute.xlu0 %804
    %v807 = vsel %vm496, %v803, 0
    %v810 = vsel %vm496, %v805, 0
    %812 = vmatpush.bf16.xpose.msra.mxu0 0
    %813 = vmatpush.bf16.xpose.msra.mxu0 0
    %814 = vmatpush.bf16.xpose.msra.mxu0 0
    %815 = vmatpush.bf16.xpose.msra.mxu0 0
    %816 = vmatpush.bf16.xpose.msra.mxu0 0
    %817 = vmatpush.bf16.xpose.msra.mxu0 0
    %818 = vmatpush.bf16.xpose.msra.mxu0 0
    %819 = vmatpush.bf16.xpose.msra.mxu0 %v810
    %820 = vmatmul.bf16.gmra.mxu0 %v807
    %v821 = vpop.f32.mrf.mxu0
    %v822 = vadd.f32 0.0, %v821
    %v823 = vpop.f32.mrf.mxu0
    %v824 = vadd.f32 0.0, %v823
    %825 = vdwg.mxu0
    %v826 = vsel %vm521, %v822, -1e+10
    %v827 = vsel %vm522, %v824, -1e+10
    %v828 = vsel %vm525, %v826, -inf
    %829 = vmax.xlane.f32.xlu0 %v828
    %v830 = vpop.xlane.xlu0 %829
    %v831 = vsel %vm525, %v827, -inf
    %832 = vmax.xlane.f32.xlu0 %v831
    %v833 = vpop.xlane.xlu0 %832
    %v834 = vsub.f32 %v826, %v830
    %v835 = vsub.f32 %v827, %v833
    %v836 = vmul.f32 %v834, 1.442695
    %v837 = vpow.pop %v836
    %v838 = vmul.f32 %v835, 1.442695
    %v839 = vpow.pop %v838
    %v840 = vsel %vm525, %v837, 0.0
    %841 = vadd.xlane.f32.xlu0 %v840
    %v842 = vpop.xlane.xlu0 %841
    %v843 = vsel %vm525, %v839, 0.0
    %844 = vadd.xlane.f32.xlu0 %v843
    %v845 = vpop.xlane.xlu0 %844
    %v846 = vrcp.pop %v842
    %v847 = vrcp.pop %v845
    %v848 = vmul.f32 %v837, %v846
    %v849 = vmul.f32 %v839, %v847
    %v850 = vpack.c.bf16 %v849, %v848
    %851 = vrot.lane.b32.xlu0 %v553, 32
    %v852 = vpop.permute.xlu0 %851
    %v855 = vsel %vm525, %v850, 0
    %857 = vmatpush.bf16.msra.mxu0 0
    %858 = vmatpush.bf16.msra.mxu0 0
    %859 = vmatpush.bf16.msra.mxu0 0
    %860 = vmatpush.bf16.msra.mxu0 0
    %861 = vmatpush.bf16.msra.mxu0 0
    %862 = vmatpush.bf16.msra.mxu0 0
    %863 = vmatpush.bf16.msra.mxu0 0
    %864 = vmatpush.bf16.msra.mxu0 %v852
    %865 = vmatmul.bf16.gmra.mxu0 %v855
    %v866 = vpop.f32.mrf.mxu0
    %v867 = vadd.f32 0.0, %v866
    %v868 = vpop.f32.mrf.mxu0
    %v869 = vadd.f32 0.0, %v868
    %870 = vdwg.mxu0
    %v871 = vpack.c.bf16 %v869, %v867
    %v876 = vunpack.c.l.b16 %v248
    %v877 = vunpack.c.l.b16 %v249
    %v878 = vunpack.c.l.b16 %v250
    %v879 = vunpack.c.l.b16 %v251
    %v880 = vpack.c.b16 %v877, %v876
    %v881 = vpack.c.b16 %v879, %v878
    %v885 = vsel %vm496, %v871, 0
    %887 = vmatpush.bf16.msra.mxu0 0
    %888 = vmatpush.bf16.msra.mxu0 0
    %889 = vmatpush.bf16.msra.mxu0 0
    %890 = vmatpush.bf16.msra.mxu0 0
    %891 = vmatpush.bf16.msra.mxu0 0
    %892 = vmatpush.bf16.msra.mxu0 0
    %893 = vmatpush.bf16.msra.mxu0 %v881
    %894 = vmatpush.bf16.msra.mxu0 %v880
    %895 = vmatmul.bf16.gmra.mxu0 %v885
    %v896 = vpop.f32.mrf.mxu0
    %v897 = vadd.f32 0.0, %v896
    %v898 = vpop.f32.mrf.mxu0
    %v899 = vadd.f32 0.0, %v898
    %900 = vdwg.mxu0
    %v901 = vadd.f32 %v800, %v897
    %v902 = vadd.f32 %v801, %v899
    %v904 = vperm.slane %v481, 0
    %v906 = vadd.f32 %v901, %v904
    %v907 = vadd.f32 %v902, %v904
    %908 = vst [vmem:[#allocation16] sm:$0xff] %v906
    %909 = vst [vmem:[#allocation16 + $0x8] sm:$0xff] %v907
    %s910 = scalar_lea.vmem [#allocation8], 4
    %v911 = vld [vmem:[%s910] sm:$0x3]
    %v912 = vld [vmem:[%s910 + $0x2] sm:$0x3]
    %vm913 = vnez %v911
    %vm914 = vnez %v912
    %v917 = vunpack.c.l.b16 %v329
    %v918 = vunpack.c.l.b16 %v330
    %v919 = vpack.c.b16 %v918, %v917
    %v922 = vunpack.c.l.b16 %v404
    %v923 = vunpack.c.l.b16 %v405
    %v924 = vpack.c.b16 %v923, %v922
    %v926 = vsel %vm496, %v919, 0
    %v929 = vsel %vm496, %v924, 0
    %931 = vmatpush.bf16.xpose.msra.mxu0 0
    %932 = vmatpush.bf16.xpose.msra.mxu0 0
    %933 = vmatpush.bf16.xpose.msra.mxu0 0
    %934 = vmatpush.bf16.xpose.msra.mxu0 0
    %935 = vmatpush.bf16.xpose.msra.mxu0 0
    %936 = vmatpush.bf16.xpose.msra.mxu0 0
    %937 = vmatpush.bf16.xpose.msra.mxu0 0
    %938 = vmatpush.bf16.xpose.msra.mxu0 %v929
    %939 = vmatmul.bf16.gmra.mxu0 %v926
    %v940 = vpop.f32.mrf.mxu0
    %v941 = vadd.f32 0.0, %v940
    %v942 = vpop.f32.mrf.mxu0
    %v943 = vadd.f32 0.0, %v942
    %944 = vdwg.mxu0
    %v945 = vsel %vm913, 16843009, 0
    %v946 = vsel %vm914, 16843009, 0
    %v947 = vunpack.c.0.s8 %v945
    %v948 = vunpack.c.0.s8 %v946
    %vm949 = vcmp.ne.s32.totalorder %v947, 0
    %vm950 = vcmp.ne.s32.totalorder %v948, 0
    %v951 = vsel %vm949, %v941, -1e+10
    %v952 = vsel %vm950, %v943, -1e+10
    %v953 = vsel %vm525, %v951, -inf
    %954 = vmax.xlane.f32.xlu0 %v953
    %v955 = vpop.xlane.xlu0 %954
    %v956 = vsel %vm525, %v952, -inf
    %957 = vmax.xlane.f32.xlu0 %v956
    %v958 = vpop.xlane.xlu0 %957
    %v959 = vsub.f32 %v951, %v955
    %v960 = vsub.f32 %v952, %v958
    %v961 = vmul.f32 %v959, 1.442695
    %v962 = vpow.pop %v961
    %v963 = vmul.f32 %v960, 1.442695
    %v964 = vpow.pop %v963
    %v965 = vsel %vm525, %v962, 0.0
    %966 = vadd.xlane.f32.xlu0 %v965
    %v967 = vpop.xlane.xlu0 %966
    %v968 = vsel %vm525, %v964, 0.0
    %969 = vadd.xlane.f32.xlu0 %v968
    %v970 = vpop.xlane.xlu0 %969
    %v971 = vrcp.pop %v967
    %v972 = vrcp.pop %v970
    %v973 = vmul.f32 %v962, %v971
    %v974 = vmul.f32 %v964, %v972
    %v975 = vpack.c.bf16 %v974, %v973
    %v978 = vunpack.c.l.b16 %v479
    %v979 = vunpack.c.l.b16 %v480
    %v980 = vpack.c.b16 %v979, %v978
    %v983 = vsel %vm525, %v975, 0
    %985 = vmatpush.bf16.msra.mxu0 0
    %986 = vmatpush.bf16.msra.mxu0 0
    %987 = vmatpush.bf16.msra.mxu0 0
    %988 = vmatpush.bf16.msra.mxu0 0
    %989 = vmatpush.bf16.msra.mxu0 0
    %990 = vmatpush.bf16.msra.mxu0 0
    %991 = vmatpush.bf16.msra.mxu0 0
    %992 = vmatpush.bf16.msra.mxu0 %v980
    %993 = vmatmul.bf16.gmra.mxu0 %v983
    %v994 = vpop.f32.mrf.mxu0
    %v995 = vadd.f32 0.0, %v994
    %v996 = vpop.f32.mrf.mxu0
    %v997 = vadd.f32 0.0, %v996
    %998 = vdwg.mxu0
    %v999 = vpack.c.bf16 %v997, %v995
    %1000 = vrot.lane.b32.xlu0 %v919, 96
    %v1001 = vpop.permute.xlu0 %1000
    %1002 = vrot.lane.b32.xlu0 %v924, 96
    %v1003 = vpop.permute.xlu0 %1002
    %v1005 = vsel %vm496, %v1001, 0
    %v1008 = vsel %vm496, %v1003, 0
    %1010 = vmatpush.bf16.xpose.msra.mxu0 0
    %1011 = vmatpush.bf16.xpose.msra.mxu0 0
    %1012 = vmatpush.bf16.xpose.msra.mxu0 0
    %1013 = vmatpush.bf16.xpose.msra.mxu0 0
    %1014 = vmatpush.bf16.xpose.msra.mxu0 0
    %1015 = vmatpush.bf16.xpose.msra.mxu0 0
    %1016 = vmatpush.bf16.xpose.msra.mxu0 0
    %1017 = vmatpush.bf16.xpose.msra.mxu0 %v1008
    %1018 = vmatmul.bf16.gmra.mxu0 %v1005
    %v1019 = vpop.f32.mrf.mxu0
    %v1020 = vadd.f32 0.0, %v1019
    %v1021 = vpop.f32.mrf.mxu0
    %v1022 = vadd.f32 0.0, %v1021
    %1023 = vdwg.mxu0
    %v1024 = vsel %vm949, %v1020, -1e+10
    %v1025 = vsel %vm950, %v1022, -1e+10
    %v1026 = vsel %vm525, %v1024, -inf
    %1027 = vmax.xlane.f32.xlu0 %v1026
    %v1028 = vpop.xlane.xlu0 %1027
    %v1029 = vsel %vm525, %v1025, -inf
    %1030 = vmax.xlane.f32.xlu0 %v1029
    %v1031 = vpop.xlane.xlu0 %1030
    %v1032 = vsub.f32 %v1024, %v1028
    %v1033 = vsub.f32 %v1025, %v1031
    %v1034 = vmul.f32 %v1032, 1.442695
    %v1035 = vpow.pop %v1034
    %v1036 = vmul.f32 %v1033, 1.442695
    %v1037 = vpow.pop %v1036
    %v1038 = vsel %vm525, %v1035, 0.0
    %1039 = vadd.xlane.f32.xlu0 %v1038
    %v1040 = vpop.xlane.xlu0 %1039
    %v1041 = vsel %vm525, %v1037, 0.0
    %1042 = vadd.xlane.f32.xlu0 %v1041
    %v1043 = vpop.xlane.xlu0 %1042
    %v1044 = vrcp.pop %v1040
    %v1045 = vrcp.pop %v1043
    %v1046 = vmul.f32 %v1035, %v1044
    %v1047 = vmul.f32 %v1037, %v1045
    %v1048 = vpack.c.bf16 %v1047, %v1046
    %1049 = vrot.lane.b32.xlu0 %v980, 96
    %v1050 = vpop.permute.xlu0 %1049
    %v1053 = vsel %vm525, %v1048, 0
    %1055 = vmatpush.bf16.msra.mxu0 0
    %1056 = vmatpush.bf16.msra.mxu0 0
    %1057 = vmatpush.bf16.msra.mxu0 0
    %1058 = vmatpush.bf16.msra.mxu0 0
    %1059 = vmatpush.bf16.msra.mxu0 0
    %1060 = vmatpush.bf16.msra.mxu0 0
    %1061 = vmatpush.bf16.msra.mxu0 0
    %1062 = vmatpush.bf16.msra.mxu0 %v1050
    %1063 = vmatmul.bf16.gmra.mxu0 %v1053
    %v1064 = vpop.f32.mrf.mxu0
    %v1065 = vadd.f32 0.0, %v1064
    %v1066 = vpop.f32.mrf.mxu0
    %v1067 = vadd.f32 0.0, %v1066
    %1068 = vdwg.mxu0
    %v1069 = vpack.c.bf16 %v1067, %v1065
    %v1071 = vsel %vm496, %v1069, 0
    %1073 = vmatpush.bf16.msra.mxu0 0
    %1074 = vmatpush.bf16.msra.mxu0 0
    %1075 = vmatpush.bf16.msra.mxu0 0
    %1076 = vmatpush.bf16.msra.mxu0 0
    %1077 = vmatpush.bf16.msra.mxu0 0
    %1078 = vmatpush.bf16.msra.mxu0 0
    %1079 = vmatpush.bf16.msra.mxu0 %v652
    %1080 = vmatpush.bf16.msra.mxu0 %v651
    %1081 = vmatmul.bf16.gmra.mxu0 %v1071
    %v1082 = vpop.f32.mrf.mxu0
    %v1083 = vadd.f32 0.0, %v1082
    %v1084 = vpop.f32.mrf.mxu0
    %v1085 = vadd.f32 0.0, %v1084
    %1086 = vdwg.mxu0
    %v1088 = vsel %vm496, %v999, 0
    %1090 = vmatpush.bf16.msra.mxu0 0
    %1091 = vmatpush.bf16.msra.mxu0 0
    %1092 = vmatpush.bf16.msra.mxu0 0
    %1093 = vmatpush.bf16.msra.mxu0 0
    %1094 = vmatpush.bf16.msra.mxu0 0
    %1095 = vmatpush.bf16.msra.mxu0 0
    %1096 = vmatpush.bf16.msra.mxu0 %v681
    %1097 = vmatpush.bf16.msra.mxu0 %v680
    %1098 = vmatmul.bf16.gmra.mxu0 %v1088
    %v1099 = vpop.f32.mrf.mxu0
    %v1100 = vadd.f32 %v1083, %v1099
    %v1101 = vpop.f32.mrf.mxu0
    %v1102 = vadd.f32 %v1085, %v1101
    %1103 = vdwg.mxu0
    %1104 = vrot.lane.b32.xlu0 %v919, 64
    %v1105 = vpop.permute.xlu0 %1104
    %1106 = vrot.lane.b32.xlu0 %v924, 64
    %v1107 = vpop.permute.xlu0 %1106
    %v1109 = vsel %vm496, %v1105, 0
    %v1112 = vsel %vm496, %v1107, 0
    %1114 = vmatpush.bf16.xpose.msra.mxu0 0
    %1115 = vmatpush.bf16.xpose.msra.mxu0 0
    %1116 = vmatpush.bf16.xpose.msra.mxu0 0
    %1117 = vmatpush.bf16.xpose.msra.mxu0 0
    %1118 = vmatpush.bf16.xpose.msra.mxu0 0
    %1119 = vmatpush.bf16.xpose.msra.mxu0 0
    %1120 = vmatpush.bf16.xpose.msra.mxu0 0
    %1121 = vmatpush.bf16.xpose.msra.mxu0 %v1112
    %1122 = vmatmul.bf16.gmra.mxu0 %v1109
    %v1123 = vpop.f32.mrf.mxu0
    %v1124 = vadd.f32 0.0, %v1123
    %v1125 = vpop.f32.mrf.mxu0
    %v1126 = vadd.f32 0.0, %v1125
    %1127 = vdwg.mxu0
    %v1128 = vsel %vm949, %v1124, -1e+10
    %v1129 = vsel %vm950, %v1126, -1e+10
    %v1130 = vsel %vm525, %v1128, -inf
    %1131 = vmax.xlane.f32.xlu0 %v1130
    %v1132 = vpop.xlane.xlu0 %1131
    %v1133 = vsel %vm525, %v1129, -inf
    %1134 = vmax.xlane.f32.xlu0 %v1133
    %v1135 = vpop.xlane.xlu0 %1134
    %v1136 = vsub.f32 %v1128, %v1132
    %v1137 = vsub.f32 %v1129, %v1135
    %v1138 = vmul.f32 %v1136, 1.442695
    %v1139 = vpow.pop %v1138
    %v1140 = vmul.f32 %v1137, 1.442695
    %v1141 = vpow.pop %v1140
    %v1142 = vsel %vm525, %v1139, 0.0
    %1143 = vadd.xlane.f32.xlu0 %v1142
    %v1144 = vpop.xlane.xlu0 %1143
    %v1145 = vsel %vm525, %v1141, 0.0
    %1146 = vadd.xlane.f32.xlu0 %v1145
    %v1147 = vpop.xlane.xlu0 %1146
    %v1148 = vrcp.pop %v1144
    %v1149 = vrcp.pop %v1147
    %v1150 = vmul.f32 %v1139, %v1148
    %v1151 = vmul.f32 %v1141, %v1149
    %v1152 = vpack.c.bf16 %v1151, %v1150
    %1153 = vrot.lane.b32.xlu0 %v980, 64
    %v1154 = vpop.permute.xlu0 %1153
    %v1157 = vsel %vm525, %v1152, 0
    %1159 = vmatpush.bf16.msra.mxu0 0
    %1160 = vmatpush.bf16.msra.mxu0 0
    %1161 = vmatpush.bf16.msra.mxu0 0
    %1162 = vmatpush.bf16.msra.mxu0 0
    %1163 = vmatpush.bf16.msra.mxu0 0
    %1164 = vmatpush.bf16.msra.mxu0 0
    %1165 = vmatpush.bf16.msra.mxu0 0
    %1166 = vmatpush.bf16.msra.mxu0 %v1154
    %1167 = vmatmul.bf16.gmra.mxu0 %v1157
    %v1168 = vpop.f32.mrf.mxu0
    %v1169 = vadd.f32 0.0, %v1168
    %v1170 = vpop.f32.mrf.mxu0
    %v1171 = vadd.f32 0.0, %v1170
    %1172 = vdwg.mxu0
    %v1173 = vpack.c.bf16 %v1171, %v1169
    %v1175 = vsel %vm496, %v1173, 0
    %1177 = vmatpush.bf16.msra.mxu0 0
    %1178 = vmatpush.bf16.msra.mxu0 0
    %1179 = vmatpush.bf16.msra.mxu0 0
    %1180 = vmatpush.bf16.msra.mxu0 0
    %1181 = vmatpush.bf16.msra.mxu0 0
    %1182 = vmatpush.bf16.msra.mxu0 0
    %1183 = vmatpush.bf16.msra.mxu0 %v780
    %1184 = vmatpush.bf16.msra.mxu0 %v779
    %1185 = vmatmul.bf16.gmra.mxu0 %v1175
    %v1186 = vpop.f32.mrf.mxu0
    %v1187 = vadd.f32 0.0, %v1186
    %v1188 = vpop.f32.mrf.mxu0
    %v1189 = vadd.f32 0.0, %v1188
    %1190 = vdwg.mxu0
    %v1191 = vadd.f32 %v1100, %v1187
    %v1192 = vadd.f32 %v1102, %v1189
    %1193 = vrot.lane.b32.xlu0 %v919, 32
    %v1194 = vpop.permute.xlu0 %1193
    %1195 = vrot.lane.b32.xlu0 %v924, 32
    %v1196 = vpop.permute.xlu0 %1195
    %v1198 = vsel %vm496, %v1194, 0
    %v1201 = vsel %vm496, %v1196, 0
    %1203 = vmatpush.bf16.xpose.msra.mxu0 0
    %1204 = vmatpush.bf16.xpose.msra.mxu0 0
    %1205 = vmatpush.bf16.xpose.msra.mxu0 0
    %1206 = vmatpush.bf16.xpose.msra.mxu0 0
    %1207 = vmatpush.bf16.xpose.msra.mxu0 0
    %1208 = vmatpush.bf16.xpose.msra.mxu0 0
    %1209 = vmatpush.bf16.xpose.msra.mxu0 0
    %1210 = vmatpush.bf16.xpose.msra.mxu0 %v1201
    %1211 = vmatmul.bf16.gmra.mxu0 %v1198
    %v1212 = vpop.f32.mrf.mxu0
    %v1213 = vadd.f32 0.0, %v1212
    %v1214 = vpop.f32.mrf.mxu0
    %v1215 = vadd.f32 0.0, %v1214
    %1216 = vdwg.mxu0
    %v1217 = vsel %vm949, %v1213, -1e+10
    %v1218 = vsel %vm950, %v1215, -1e+10
    %v1219 = vsel %vm525, %v1217, -inf
    %1220 = vmax.xlane.f32.xlu0 %v1219
    %v1221 = vpop.xlane.xlu0 %1220
    %v1222 = vsel %vm525, %v1218, -inf
    %1223 = vmax.xlane.f32.xlu0 %v1222
    %v1224 = vpop.xlane.xlu0 %1223
    %v1225 = vsub.f32 %v1217, %v1221
    %v1226 = vsub.f32 %v1218, %v1224
    %v1227 = vmul.f32 %v1225, 1.442695
    %v1228 = vpow.pop %v1227
    %v1229 = vmul.f32 %v1226, 1.442695
    %v1230 = vpow.pop %v1229
    %v1231 = vsel %vm525, %v1228, 0.0
    %1232 = vadd.xlane.f32.xlu0 %v1231
    %v1233 = vpop.xlane.xlu0 %1232
    %v1234 = vsel %vm525, %v1230, 0.0
    %1235 = vadd.xlane.f32.xlu0 %v1234
    %v1236 = vpop.xlane.xlu0 %1235
    %v1237 = vrcp.pop %v1233
    %v1238 = vrcp.pop %v1236
    %v1239 = vmul.f32 %v1228, %v1237
    %v1240 = vmul.f32 %v1230, %v1238
    %v1241 = vpack.c.bf16 %v1240, %v1239
    %1242 = vrot.lane.b32.xlu0 %v980, 32
    %v1243 = vpop.permute.xlu0 %1242
    %v1246 = vsel %vm525, %v1241, 0
    %1248 = vmatpush.bf16.msra.mxu0 0
    %1249 = vmatpush.bf16.msra.mxu0 0
    %1250 = vmatpush.bf16.msra.mxu0 0
    %1251 = vmatpush.bf16.msra.mxu0 0
    %1252 = vmatpush.bf16.msra.mxu0 0
    %1253 = vmatpush.bf16.msra.mxu0 0
    %1254 = vmatpush.bf16.msra.mxu0 0
    %1255 = vmatpush.bf16.msra.mxu0 %v1243
    %1256 = vmatmul.bf16.gmra.mxu0 %v1246
    %v1257 = vpop.f32.mrf.mxu0
    %v1258 = vadd.f32 0.0, %v1257
    %v1259 = vpop.f32.mrf.mxu0
    %v1260 = vadd.f32 0.0, %v1259
    %1261 = vdwg.mxu0
    %v1262 = vpack.c.bf16 %v1260, %v1258
    %v1264 = vsel %vm496, %v1262, 0
    %1266 = vmatpush.bf16.msra.mxu0 0
    %1267 = vmatpush.bf16.msra.mxu0 0
    %1268 = vmatpush.bf16.msra.mxu0 0
    %1269 = vmatpush.bf16.msra.mxu0 0
    %1270 = vmatpush.bf16.msra.mxu0 0
    %1271 = vmatpush.bf16.msra.mxu0 0
    %1272 = vmatpush.bf16.msra.mxu0 %v881
    %1273 = vmatpush.bf16.msra.mxu0 %v880
    %1274 = vmatmul.bf16.gmra.mxu0 %v1264
    %v1275 = vpop.f32.mrf.mxu0
    %v1276 = vadd.f32 0.0, %v1275
    %v1277 = vpop.f32.mrf.mxu0
    %v1278 = vadd.f32 0.0, %v1277
    %1279 = vdwg.mxu0
    %v1280 = vadd.f32 %v1191, %v1276
    %v1281 = vadd.f32 %v1192, %v1278
    %v1282 = vadd.f32 %v1280, %v904
    %v1283 = vadd.f32 %v1281, %v904
    %s1284 = scalar_lea.vmem [#allocation16], 16
    %1285 = vst [vmem:[%s1284] sm:$0xff] %v1282
    %1286 = vst [vmem:[%s1284 + $0x8] sm:$0xff] %v1283
    // Predicated region
    $region82: #{tpu_custom_call.1} parent=1 // pred_check
      _
    $region83: #{tpu_custom_call.1} parent=1 // pred_check_branch
      %1288 = sbr.rel (0) target = $region85
    $region84: #{tpu_custom_call.1} parent=1 // pred_region
      %1290 = vsyncadd [#allocation4], 0
      %s1291 = sshll.u32 [#allocation16], 4
      %s1292 = int_to_ptr.vmem [resolvable:$true] %s1291
      %s1293 = sshll.u32 %s12, 4
      %s1294 = int_to_ptr.hbm [resolvable:$true] %s1293
      %1299 = dma.vmem_to_hbm [thread:$0]  %s1292, 512, %s1294, [#allocation4], 128, 128, 8
    $region85: #{tpu_custom_call.1} parent=1 // pred_fallthru
      _
    // Predicated region
    $region86: #{tpu_custom_call.1} parent=1 // pred_check
      _
    $region87: #{tpu_custom_call.1} parent=1 // pred_check_branch
      %1301 = sbr.rel (0) target = $region89
    $region88: #{tpu_custom_call.1} parent=1 // pred_region
      %1303 = dma.done [#allocation4], 512
    $region89: #{tpu_custom_call.1} parent=1 // pred_fallthru
      _
    %1304 = vsyncpa [#allocation3], 1
    %1305 = vsyncpa [#allocation6], 1
    %1306 = vsyncpa [#allocation9], 1
    %1307 = vsyncpa [#allocation12], 1
    %1308 = vsyncpa [#allocation15], 1
    %1309 = vsyncpa [#allocation4], 1

</llo_original>
